<compile_context>
chip_gen: v5e
topology: v5e:2x2
jax: 0.10.0
libtpu: 0.0.40
codegen_flags: <defaults>
</compile_context>

<pallas_src>
import functools

import numpy as np
import jax
import jax.numpy as jnp
from jax.experimental import pallas as pl
from jax.experimental.pallas import tpu as pltpu


def cbam_kernel(w1t_ref, w2m_ref, wtap_ref, x_ref, o_ref, xs_ref, *, W, K):
    """One batch block of CBAM.

    w1t_ref  : VMEM (1, C, Cr)    first 1x1 MLP weight, transposed (w1[r,c] -> [c,r])
    w2m_ref  : VMEM (1, C, Cr)    second 1x1 MLP weight             (w2[c,r])
    wtap_ref : VMEM (K*K, 2, HW)  masked per-tap spatial-conv weight rows
                                  (row 0 = max channel, row 1 = avg channel
                                   pre-scaled by 1/C; zeros at padding).
    x_ref    : VMEM (NB, C, HW)   input block, spatial flattened (lane-dense)
    o_ref    : VMEM (NB, C, HW)   output block
    xs_ref   : VMEM (NB, C, HW)   f32 scratch for the channel-gated activation
    """
    NB, C, HW = x_ref.shape
    P = K // 2
    inv_hw = 1.0 / HW

    # ---------------- channel attention (tiny C -> C/r -> C MLP) -----------
    x = x_ref[...].astype(jnp.float32)                       # (NB, C, HW)
    pm = jnp.max(x, axis=2, keepdims=True)                   # (NB, C, 1)
    pa = jnp.sum(x, axis=2, keepdims=True) * inv_hw          # (NB, C, 1)

    w1t = w1t_ref[...]                                       # (1, C, Cr)
    w2m = w2m_ref[...]                                       # (1, C, Cr)

    def mlp(p):                                              # p: (NB, C, 1)
        # h[n, r] = relu(sum_c p[n, c] * w1[r, c])
        h = jnp.sum(p * w1t, axis=1, keepdims=True)          # (NB, 1, Cr)
        h = jnp.maximum(h, 0.0)
        # g[n, c] = sum_r h[n, r] * w2[c, r]
        return jnp.sum(h * w2m, axis=2, keepdims=True)       # (NB, C, 1)

    ch_gate = jax.nn.sigmoid(mlp(pm) + mlp(pa))              # (NB, C, 1)

    # Stage xs through explicit VMEM scratch (re-read below) so the compiler
    # never has to keep the whole (NB, C, HW) value live in vregs / spills.
    xs_ref[...] = ch_gate * x_ref[...].astype(jnp.float32)

    # ---------------- spatial attention -------------------------------------
    xs = xs_ref[...]                                         # (NB, C, HW)
    m_max = jnp.max(xs, axis=1, keepdims=True)               # (NB, 1, HW)
    m_sum = jnp.sum(xs, axis=1, keepdims=True)               # (NB, 1, HW) (1/C in weights)

    # Stack both conv input channels on the sublane axis: (NB, 2, HW).
    sel0 = jax.lax.broadcasted_iota(jnp.int32, (NB, 2, HW), 1) == 0
    stacked = jnp.where(sel0, m_max, m_sum)                  # (NB, 2, HW)

    # KxK 'same' conv, fully unrolled: one lane-roll (XLU) + one FMA against a
    # precomputed masked weight row per tap.  No masks/selects in the loop.
    acc = jnp.zeros((NB, 2, HW), jnp.float32)
    t = 0
    for di in range(-P, P + 1):
        for dj in range(-P, P + 1):
            shift = (-(di * W + dj)) % HW
            if shift == 0:
                r = stacked
            else:
                r = pltpu.roll(stacked, shift=shift, axis=2)
            acc = acc + r * wtap_ref[t]                      # (2,HW) bcast over NB
            t += 1

    conv = jnp.sum(acc, axis=1, keepdims=True)               # (NB, 1, HW)
    sp_gate = jax.nn.sigmoid(conv)
    o_ref[...] = (sp_gate * xs_ref[...]).astype(o_ref.dtype)


def cbam_forward(x, w1, w2, w_spatial, *, batch_block=None):
    """x: (N, C, H, W). w1: (C//r, C, 1, 1). w2: (C, C//r, 1, 1).
    w_spatial: (1, 2, K, K). All conv layers are bias-free (as in CBAMLayer)."""
    N, C, H, W = x.shape
    Cr = w1.shape[0]
    K = w_spatial.shape[-1]
    P = K // 2
    HW = H * W

    # Lane-dense view: flatten spatial into the lane axis (HW multiple of 128
    # here -> full-width vector ops and unmasked output stores).
    x_flat = x.reshape(N, C, HW)

    # Squeezed 1x1-conv MLP weights, both laid out as (1, C, Cr).
    w1t = jnp.transpose(w1[:, :, 0, 0]).astype(jnp.float32)[None]    # (1, C, Cr)
    w2m = w2[:, :, 0, 0].astype(jnp.float32)[None]                   # (1, C, Cr)

    # Precompute per-tap *masked* spatial-conv weight rows: for tap (di, dj)
    # and output pixel p the weight is zero when the source pixel would fall
    # outside the zero-padded image.  Channel 1 (avg) is pre-scaled by 1/C
    # (the kernel accumulates a channel *sum*).  Shape (K*K, 2, HW).
    pos = np.arange(HW)
    ri, ci = pos // W, pos % W
    masks = []
    for di in range(-P, P + 1):
        for dj in range(-P, P + 1):
            valid = ((ri + di >= 0) & (ri + di < H) &
                     (ci + dj >= 0) & (ci + dj < W)).astype(np.float32)
            masks.append(valid)
    mask = jnp.asarray(np.stack(masks, axis=0))[:, None, :]          # (K*K, 1, HW)
    w_vals = jnp.stack(
        [w_spatial[0, 0].reshape(-1),
         w_spatial[0, 1].reshape(-1) * (1.0 / C)], axis=1).astype(jnp.float32)  # (K*K, 2)
    w_tap = mask * w_vals[:, :, None]                                # (K*K, 2, HW)

    # Batch block: VMEM accounting includes the double-buffered in/out blocks
    # (2x each), the f32 xs scratch and an f32 working copy; ~12 MiB budget so
    # it fits v5e's 16 MiB scoped-VMEM default (and v6e/v7x's 32 MiB) without
    # raising vmem_limit_bytes.  Also keep >= 2 grid steps so the "parallel"
    # batch axis can shard across v7x's 2 TensorCores.
    itemsize = jnp.dtype(x.dtype).itemsize
    if batch_block is None:
        per_image = C * HW * (2 * itemsize + 2 * itemsize + 4 + 4)
        fixed = 2 * 4 * (w_tap.size + w1t.size + w2m.size)
        budget = 12 * 1024 * 1024
        batch_block = max(1, int((budget - fixed) // max(per_image, 1)))
        if N >= 2:
            batch_block = min(batch_block, pl.cdiv(N, 2))
        batch_block = min(batch_block, N)
    batch_block = int(batch_block)
    while N % batch_block:
        batch_block -= 1
    NB = batch_block

    kernel = functools.partial(cbam_kernel, W=W, K=K)
    out_flat = pl.pallas_call(
        kernel,
        out_shape=jax.ShapeDtypeStruct((N, C, HW), x.dtype),
        grid=(N // NB,),
        in_specs=[
            pl.BlockSpec((1, C, Cr), lambda b: (0, 0, 0)),        # w1^T
            pl.BlockSpec((1, C, Cr), lambda b: (0, 0, 0)),        # w2
            pl.BlockSpec((K * K, 2, HW), lambda b: (0, 0, 0)),    # masked tap weights
            pl.BlockSpec((NB, C, HW), lambda b: (b, 0, 0)),       # x batch block
        ],
        out_specs=pl.BlockSpec((NB, C, HW), lambda b: (b, 0, 0)),
        scratch_shapes=[pltpu.VMEM((NB, C, HW), jnp.float32)],    # xs staging
        compiler_params=pltpu.CompilerParams(
            dimension_semantics=("parallel",)),
    )(w1t, w2m, w_tap, x_flat)
    return out_flat.reshape(N, C, H, W)


def cbam_reference(x, w1, w2, w_spatial):
    """Pure-JAX reference matching PyTorch CBAMLayer.forward."""
    dn = ("NCHW", "OIHW", "NCHW")

    def conv1x1(v, w):
        return jax.lax.conv_general_dilated(v, w, (1, 1), "VALID",
                                            dimension_numbers=dn)

    def mlp(v):
        return conv1x1(jnp.maximum(conv1x1(v, w1), 0.0), w2)

    max_pool = jnp.max(x, axis=(2, 3), keepdims=True)
    avg_pool = jnp.mean(x, axis=(2, 3), keepdims=True)
    ch = jax.nn.sigmoid(mlp(max_pool) + mlp(avg_pool))
    xs = ch * x
    mx = jnp.max(xs, axis=1, keepdims=True)
    av = jnp.mean(xs, axis=1, keepdims=True)
    P = w_spatial.shape[-1] // 2
    conv = jax.lax.conv_general_dilated(
        jnp.concatenate([mx, av], axis=1), w_spatial, (1, 1),
        [(P, P), (P, P)], dimension_numbers=dn)
    return jax.nn.sigmoid(conv) * xs


if __name__ == "__main__":
    key = jax.random.PRNGKey(0)
    kx, k1, k2, k3 = jax.random.split(key, 4)

    N, C, H, W = 2, 32, 16, 16     # H*W = 256 -> lane-dense
    reduction, K = 4, 7            # CBAMLayer(channel=32, reduction=4, spatial_kernel=7)
    Cr = C // reduction

    x = jax.random.normal(kx, (N, C, H, W), dtype=jnp.float32)

    # PyTorch-style uniform(-1/sqrt(fan_in), 1/sqrt(fan_in)) conv inits.
    b1 = 1.0 / (C ** 0.5)
    w1 = jax.random.uniform(k1, (Cr, C, 1, 1), jnp.float32, minval=-b1, maxval=b1)
    b2 = 1.0 / (Cr ** 0.5)
    w2 = jax.random.uniform(k2, (C, Cr, 1, 1), jnp.float32, minval=-b2, maxval=b2)
    b3 = 1.0 / ((2 * K * K) ** 0.5)
    w_spatial = jax.random.uniform(k3, (1, 2, K, K), jnp.float32,
                                   minval=-b3, maxval=b3)

    out = jax.block_until_ready(cbam_forward(x, w1, w2, w_spatial))
    ref = jax.block_until_ready(cbam_reference(x, w1, w2, w_spatial))

    assert out.shape == x.shape
    err = jnp.max(jnp.abs(out - ref))
    assert jnp.allclose(out, ref, atol=1e-4, rtol=1e-4), f"mismatch: max abs err {err}"

    print("KERNEL_OK")
</pallas_src>

<mosaic_0001>
module attributes {stable_mosaic.version = 11 : i64} {
  func.func @cbam_kernel(%arg0: i32, %arg1: memref<1x32x8xf32, #tpu.memory_space<vmem>>, %arg2: memref<1x32x8xf32, #tpu.memory_space<vmem>>, %arg3: memref<49x2x256xf32, #tpu.memory_space<vmem>>, %arg4: memref<1x32x256xf32, #tpu.memory_space<vmem>>, %arg5: memref<1x32x256xf32, #tpu.memory_space<vmem>>, %arg6: memref<1x32x256xf32, #tpu.memory_space<vmem>>) attributes {dimension_semantics = [#tpu.dimension_semantics<parallel>], iteration_bounds = array<i64: 2>, scalar_prefetch = 0 : i64, scratch_operands = 1 : i64, tpu.core_type = #tpu.core_type<tc>, window_params = [{pipeline_mode = #tpu.pipeline_mode<synchronous>, transform_indices = @transform_0, window_bounds = array<i64: 1, 32, 8>}, {pipeline_mode = #tpu.pipeline_mode<synchronous>, transform_indices = @transform_1, window_bounds = array<i64: 1, 32, 8>}, {pipeline_mode = #tpu.pipeline_mode<synchronous>, transform_indices = @transform_2, window_bounds = array<i64: 49, 2, 256>}, {transform_indices = @transform_3, window_bounds = array<i64: 1, 32, 256>}, {transform_indices = @transform_4, window_bounds = array<i64: 1, 32, 256>}]} {
    %c0 = arith.constant 0 : index
    %c0_0 = arith.constant 0 : index
    %c0_1 = arith.constant 0 : index
    %0 = vector.load %arg4[%c0, %c0_0, %c0_1] : memref<1x32x256xf32, #tpu.memory_space<vmem>>, vector<1x32x256xf32>
    %cst = arith.constant dense<0xFF800000> : vector<1x32xf32>
    %1 = vector.multi_reduction <maximumf>, %0, %cst [2] : vector<1x32x256xf32> to vector<1x32xf32>
    %2 = vector.shape_cast %1 : vector<1x32xf32> to vector<1x32x1xf32>
    %cst_2 = arith.constant dense<0.000000e+00> : vector<1x32xf32>
    %3 = vector.multi_reduction <add>, %0, %cst_2 [2] : vector<1x32x256xf32> to vector<1x32xf32>
    %4 = vector.shape_cast %3 : vector<1x32xf32> to vector<1x32x1xf32>
    %cst_3 = arith.constant 3.906250e-03 : f32
    %5 = vector.broadcast %cst_3 : f32 to vector<1x32x1xf32>
    %6 = arith.mulf %4, %5 : vector<1x32x1xf32>
    %c0_4 = arith.constant 0 : index
    %c0_5 = arith.constant 0 : index
    %c0_6 = arith.constant 0 : index
    %7 = vector.load %arg1[%c0_4, %c0_5, %c0_6] : memref<1x32x8xf32, #tpu.memory_space<vmem>>, vector<1x32x8xf32>
    %c0_7 = arith.constant 0 : index
    %c0_8 = arith.constant 0 : index
    %c0_9 = arith.constant 0 : index
    %8 = vector.load %arg2[%c0_7, %c0_8, %c0_9] : memref<1x32x8xf32, #tpu.memory_space<vmem>>, vector<1x32x8xf32>
    %9 = vector.broadcast %2 : vector<1x32x1xf32> to vector<1x32x8xf32>
    %10 = arith.mulf %9, %7 : vector<1x32x8xf32>
    %cst_10 = arith.constant dense<0.000000e+00> : vector<1x8xf32>
    %11 = vector.multi_reduction <add>, %10, %cst_10 [1] : vector<1x32x8xf32> to vector<1x8xf32>
    %12 = vector.shape_cast %11 : vector<1x8xf32> to vector<1x1x8xf32>
    %cst_11 = arith.constant 0.000000e+00 : f32
    %13 = vector.broadcast %cst_11 : f32 to vector<1x1x8xf32>
    %14 = arith.maximumf %12, %13 : vector<1x1x8xf32>
    %15 = vector.broadcast %14 : vector<1x1x8xf32> to vector<1x32x8xf32>
    %16 = arith.mulf %15, %8 : vector<1x32x8xf32>
    %cst_12 = arith.constant dense<0.000000e+00> : vector<1x32xf32>
    %17 = vector.multi_reduction <add>, %16, %cst_12 [2] : vector<1x32x8xf32> to vector<1x32xf32>
    %18 = vector.shape_cast %17 : vector<1x32xf32> to vector<1x32x1xf32>
    %19 = vector.broadcast %6 : vector<1x32x1xf32> to vector<1x32x8xf32>
    %20 = arith.mulf %19, %7 : vector<1x32x8xf32>
    %cst_13 = arith.constant dense<0.000000e+00> : vector<1x8xf32>
    %21 = vector.multi_reduction <add>, %20, %cst_13 [1] : vector<1x32x8xf32> to vector<1x8xf32>
    %22 = vector.shape_cast %21 : vector<1x8xf32> to vector<1x1x8xf32>
    %cst_14 = arith.constant 0.000000e+00 : f32
    %23 = vector.broadcast %cst_14 : f32 to vector<1x1x8xf32>
    %24 = arith.maximumf %22, %23 : vector<1x1x8xf32>
    %25 = vector.broadcast %24 : vector<1x1x8xf32> to vector<1x32x8xf32>
    %26 = arith.mulf %25, %8 : vector<1x32x8xf32>
    %cst_15 = arith.constant dense<0.000000e+00> : vector<1x32xf32>
    %27 = vector.multi_reduction <add>, %26, %cst_15 [2] : vector<1x32x8xf32> to vector<1x32xf32>
    %28 = vector.shape_cast %27 : vector<1x32xf32> to vector<1x32x1xf32>
    %29 = arith.addf %18, %28 : vector<1x32x1xf32>
    %30 = arith.negf %29 : vector<1x32x1xf32>
    %31 = math.exp %30 : vector<1x32x1xf32>
    %cst_16 = arith.constant 1.000000e+00 : f32
    %32 = vector.broadcast %cst_16 : f32 to vector<1x32x1xf32>
    %33 = arith.addf %32, %31 : vector<1x32x1xf32>
    %34 = arith.divf %32, %33 : vector<1x32x1xf32>
    %c0_17 = arith.constant 0 : index
    %c0_18 = arith.constant 0 : index
    %c0_19 = arith.constant 0 : index
    %35 = vector.load %arg4[%c0_17, %c0_18, %c0_19] : memref<1x32x256xf32, #tpu.memory_space<vmem>>, vector<1x32x256xf32>
    %36 = vector.broadcast %34 : vector<1x32x1xf32> to vector<1x32x256xf32>
    %37 = arith.mulf %36, %35 : vector<1x32x256xf32>
    %c0_20 = arith.constant 0 : index
    %c0_21 = arith.constant 0 : index
    %c0_22 = arith.constant 0 : index
    %38 = vector.load %arg6[%c0_20, %c0_21, %c0_22] : memref<1x32x256xf32, #tpu.memory_space<vmem>>, vector<1x32x256xf32>
    tpu.vector_store %arg6[%c0_20, %c0_21, %c0_22], %37 {strides = array<i32>} : memref<1x32x256xf32, #tpu.memory_space<vmem>>, vector<1x32x256xf32>,
    %c0_23 = arith.constant 0 : index
    %c0_24 = arith.constant 0 : index
    %c0_25 = arith.constant 0 : index
    %39 = vector.load %arg6[%c0_23, %c0_24, %c0_25] : memref<1x32x256xf32, #tpu.memory_space<vmem>>, vector<1x32x256xf32>
    %cst_26 = arith.constant dense<0xFF800000> : vector<1x256xf32>
    %40 = vector.multi_reduction <maximumf>, %39, %cst_26 [1] : vector<1x32x256xf32> to vector<1x256xf32>
    %41 = vector.shape_cast %40 : vector<1x256xf32> to vector<1x1x256xf32>
    %cst_27 = arith.constant dense<0.000000e+00> : vector<1x256xf32>
    %42 = vector.multi_reduction <add>, %39, %cst_27 [1] : vector<1x32x256xf32> to vector<1x256xf32>
    %43 = vector.shape_cast %42 : vector<1x256xf32> to vector<1x1x256xf32>
    %44 = tpu.iota {dimensions = array<i32: 1>} : vector<1x2x256xi32>
    %c0_i32 = arith.constant 0 : i32
    %45 = vector.broadcast %c0_i32 : i32 to vector<1x2x256xi32>
    %46 = arith.cmpi eq, %44, %45 : vector<1x2x256xi32>
    %47 = vector.shape_cast %41 : vector<1x1x256xf32> to vector<1x1x256xf32>
    %48 = vector.broadcast %47 : vector<1x1x256xf32> to vector<1x2x256xf32>
    %49 = vector.shape_cast %43 : vector<1x1x256xf32> to vector<1x1x256xf32>
    %50 = vector.broadcast %49 : vector<1x1x256xf32> to vector<1x2x256xf32>
    %51 = arith.select %46, %48, %50 : vector<1x2x256xi1>, vector<1x2x256xf32>
    %cst_28 = arith.constant 0.000000e+00 : f32
    %52 = vector.broadcast %cst_28 : f32 to vector<1x2x256xf32>
    %c51_i32 = arith.constant 51 : i32
    %53 = tpu.dynamic_rotate %51 by %c51_i32 dim 2 : vector<1x2x256xf32>, i32 -> vector<1x2x256xf32>
    %c0_29 = arith.constant 0 : index
    %c0_30 = arith.constant 0 : index
    %c0_31 = arith.constant 0 : index
    %54 = vector.load %arg3[%c0_29, %c0_30, %c0_31] : memref<49x2x256xf32, #tpu.memory_space<vmem>>, vector<1x2x256xf32>
    %55 = vector.shape_cast %54 : vector<1x2x256xf32> to vector<2x256xf32>
    %56 = vector.shape_cast %55 : vector<2x256xf32> to vector<1x2x256xf32>
    %57 = arith.mulf %53, %56 : vector<1x2x256xf32>
    %58 = arith.addf %52, %57 : vector<1x2x256xf32>
    %c50_i32 = arith.constant 50 : i32
    %59 = tpu.dynamic_rotate %51 by %c50_i32 dim 2 : vector<1x2x256xf32>, i32 -> vector<1x2x256xf32>
    %c1 = arith.constant 1 : index
    %c0_32 = arith.constant 0 : index
    %c0_33 = arith.constant 0 : index
    %60 = vector.load %arg3[%c1, %c0_32, %c0_33] : memref<49x2x256xf32, #tpu.memory_space<vmem>>, vector<1x2x256xf32>
    %61 = vector.shape_cast %60 : vector<1x2x256xf32> to vector<2x256xf32>
    %62 = vector.shape_cast %61 : vector<2x256xf32> to vector<1x2x256xf32>
    %63 = arith.mulf %59, %62 : vector<1x2x256xf32>
    %64 = arith.addf %58, %63 : vector<1x2x256xf32>
    %c49_i32 = arith.constant 49 : i32
    %65 = tpu.dynamic_rotate %51 by %c49_i32 dim 2 : vector<1x2x256xf32>, i32 -> vector<1x2x256xf32>
    %c2 = arith.constant 2 : index
    %c0_34 = arith.constant 0 : index
    %c0_35 = arith.constant 0 : index
    %66 = vector.load %arg3[%c2, %c0_34, %c0_35] : memref<49x2x256xf32, #tpu.memory_space<vmem>>, vector<1x2x256xf32>
    %67 = vector.shape_cast %66 : vector<1x2x256xf32> to vector<2x256xf32>
    %68 = vector.shape_cast %67 : vector<2x256xf32> to vector<1x2x256xf32>
    %69 = arith.mulf %65, %68 : vector<1x2x256xf32>
    %70 = arith.addf %64, %69 : vector<1x2x256xf32>
    %c48_i32 = arith.constant 48 : i32
    %71 = tpu.dynamic_rotate %51 by %c48_i32 dim 2 : vector<1x2x256xf32>, i32 -> vector<1x2x256xf32>
    %c3 = arith.constant 3 : index
    %c0_36 = arith.constant 0 : index
    %c0_37 = arith.constant 0 : index
    %72 = vector.load %arg3[%c3, %c0_36, %c0_37] : memref<49x2x256xf32, #tpu.memory_space<vmem>>, vector<1x2x256xf32>
    %73 = vector.shape_cast %72 : vector<1x2x256xf32> to vector<2x256xf32>
    %74 = vector.shape_cast %73 : vector<2x256xf32> to vector<1x2x256xf32>
    %75 = arith.mulf %71, %74 : vector<1x2x256xf32>
    %76 = arith.addf %70, %75 : vector<1x2x256xf32>
    %c47_i32 = arith.constant 47 : i32
    %77 = tpu.dynamic_rotate %51 by %c47_i32 dim 2 : vector<1x2x256xf32>, i32 -> vector<1x2x256xf32>
    %c4 = arith.constant 4 : index
    %c0_38 = arith.constant 0 : index
    %c0_39 = arith.constant 0 : index
    %78 = vector.load %arg3[%c4, %c0_38, %c0_39] : memref<49x2x256xf32, #tpu.memory_space<vmem>>, vector<1x2x256xf32>
    %79 = vector.shape_cast %78 : vector<1x2x256xf32> to vector<2x256xf32>
    %80 = vector.shape_cast %79 : vector<2x256xf32> to vector<1x2x256xf32>
    %81 = arith.mulf %77, %80 : vector<1x2x256xf32>
    %82 = arith.addf %76, %81 : vector<1x2x256xf32>
    %c46_i32 = arith.constant 46 : i32
    %83 = tpu.dynamic_rotate %51 by %c46_i32 dim 2 : vector<1x2x256xf32>, i32 -> vector<1x2x256xf32>
    %c5 = arith.constant 5 : index
    %c0_40 = arith.constant 0 : index
    %c0_41 = arith.constant 0 : index
    %84 = vector.load %arg3[%c5, %c0_40, %c0_41] : memref<49x2x256xf32, #tpu.memory_space<vmem>>, vector<1x2x256xf32>
    %85 = vector.shape_cast %84 : vector<1x2x256xf32> to vector<2x256xf32>
    %86 = vector.shape_cast %85 : vector<2x256xf32> to vector<1x2x256xf32>
    %87 = arith.mulf %83, %86 : vector<1x2x256xf32>
    %88 = arith.addf %82, %87 : vector<1x2x256xf32>
    %c45_i32 = arith.constant 45 : i32
    %89 = tpu.dynamic_rotate %51 by %c45_i32 dim 2 : vector<1x2x256xf32>, i32 -> vector<1x2x256xf32>
    %c6 = arith.constant 6 : index
    %c0_42 = arith.constant 0 : index
    %c0_43 = arith.constant 0 : index
    %90 = vector.load %arg3[%c6, %c0_42, %c0_43] : memref<49x2x256xf32, #tpu.memory_space<vmem>>, vector<1x2x256xf32>
    %91 = vector.shape_cast %90 : vector<1x2x256xf32> to vector<2x256xf32>
    %92 = vector.shape_cast %91 : vector<2x256xf32> to vector<1x2x256xf32>
    %93 = arith.mulf %89, %92 : vector<1x2x256xf32>
    %94 = arith.addf %88, %93 : vector<1x2x256xf32>
    %c35_i32 = arith.constant 35 : i32
    %95 = tpu.dynamic_rotate %51 by %c35_i32 dim 2 : vector<1x2x256xf32>, i32 -> vector<1x2x256xf32>
    %c7 = arith.constant 7 : index
    %c0_44 = arith.constant 0 : index
    %c0_45 = arith.constant 0 : index
    %96 = vector.load %arg3[%c7, %c0_44, %c0_45] : memref<49x2x256xf32, #tpu.memory_space<vmem>>, vector<1x2x256xf32>
    %97 = vector.shape_cast %96 : vector<1x2x256xf32> to vector<2x256xf32>
    %98 = vector.shape_cast %97 : vector<2x256xf32> to vector<1x2x256xf32>
    %99 = arith.mulf %95, %98 : vector<1x2x256xf32>
    %100 = arith.addf %94, %99 : vector<1x2x256xf32>
    %c34_i32 = arith.constant 34 : i32
    %101 = tpu.dynamic_rotate %51 by %c34_i32 dim 2 : vector<1x2x256xf32>, i32 -> vector<1x2x256xf32>
    %c8 = arith.constant 8 : index
    %c0_46 = arith.constant 0 : index
    %c0_47 = arith.constant 0 : index
    %102 = vector.load %arg3[%c8, %c0_46, %c0_47] : memref<49x2x256xf32, #tpu.memory_space<vmem>>, vector<1x2x256xf32>
    %103 = vector.shape_cast %102 : vector<1x2x256xf32> to vector<2x256xf32>
    %104 = vector.shape_cast %103 : vector<2x256xf32> to vector<1x2x256xf32>
    %105 = arith.mulf %101, %104 : vector<1x2x256xf32>
    %106 = arith.addf %100, %105 : vector<1x2x256xf32>
    %c33_i32 = arith.constant 33 : i32
    %107 = tpu.dynamic_rotate %51 by %c33_i32 dim 2 : vector<1x2x256xf32>, i32 -> vector<1x2x256xf32>
    %c9 = arith.constant 9 : index
    %c0_48 = arith.constant 0 : index
    %c0_49 = arith.constant 0 : index
    %108 = vector.load %arg3[%c9, %c0_48, %c0_49] : memref<49x2x256xf32, #tpu.memory_space<vmem>>, vector<1x2x256xf32>
    %109 = vector.shape_cast %108 : vector<1x2x256xf32> to vector<2x256xf32>
    %110 = vector.shape_cast %109 : vector<2x256xf32> to vector<1x2x256xf32>
    %111 = arith.mulf %107, %110 : vector<1x2x256xf32>
    %112 = arith.addf %106, %111 : vector<1x2x256xf32>
    %c32_i32 = arith.constant 32 : i32
    %113 = tpu.dynamic_rotate %51 by %c32_i32 dim 2 : vector<1x2x256xf32>, i32 -> vector<1x2x256xf32>
    %c10 = arith.constant 10 : index
    %c0_50 = arith.constant 0 : index
    %c0_51 = arith.constant 0 : index
    %114 = vector.load %arg3[%c10, %c0_50, %c0_51] : memref<49x2x256xf32, #tpu.memory_space<vmem>>, vector<1x2x256xf32>
    %115 = vector.shape_cast %114 : vector<1x2x256xf32> to vector<2x256xf32>
    %116 = vector.shape_cast %115 : vector<2x256xf32> to vector<1x2x256xf32>
    %117 = arith.mulf %113, %116 : vector<1x2x256xf32>
    %118 = arith.addf %112, %117 : vector<1x2x256xf32>
    %c31_i32 = arith.constant 31 : i32
    %119 = tpu.dynamic_rotate %51 by %c31_i32 dim 2 : vector<1x2x256xf32>, i32 -> vector<1x2x256xf32>
    %c11 = arith.constant 11 : index
    %c0_52 = arith.constant 0 : index
    %c0_53 = arith.constant 0 : index
    %120 = vector.load %arg3[%c11, %c0_52, %c0_53] : memref<49x2x256xf32, #tpu.memory_space<vmem>>, vector<1x2x256xf32>
    %121 = vector.shape_cast %120 : vector<1x2x256xf32> to vector<2x256xf32>
    %122 = vector.shape_cast %121 : vector<2x256xf32> to vector<1x2x256xf32>
    %123 = arith.mulf %119, %122 : vector<1x2x256xf32>
    %124 = arith.addf %118, %123 : vector<1x2x256xf32>
    %c30_i32 = arith.constant 30 : i32
    %125 = tpu.dynamic_rotate %51 by %c30_i32 dim 2 : vector<1x2x256xf32>, i32 -> vector<1x2x256xf32>
    %c12 = arith.constant 12 : index
    %c0_54 = arith.constant 0 : index
    %c0_55 = arith.constant 0 : index
    %126 = vector.load %arg3[%c12, %c0_54, %c0_55] : memref<49x2x256xf32, #tpu.memory_space<vmem>>, vector<1x2x256xf32>
    %127 = vector.shape_cast %126 : vector<1x2x256xf32> to vector<2x256xf32>
    %128 = vector.shape_cast %127 : vector<2x256xf32> to vector<1x2x256xf32>
    %129 = arith.mulf %125, %128 : vector<1x2x256xf32>
    %130 = arith.addf %124, %129 : vector<1x2x256xf32>
    %c29_i32 = arith.constant 29 : i32
    %131 = tpu.dynamic_rotate %51 by %c29_i32 dim 2 : vector<1x2x256xf32>, i32 -> vector<1x2x256xf32>
    %c13 = arith.constant 13 : index
    %c0_56 = arith.constant 0 : index
    %c0_57 = arith.constant 0 : index
    %132 = vector.load %arg3[%c13, %c0_56, %c0_57] : memref<49x2x256xf32, #tpu.memory_space<vmem>>, vector<1x2x256xf32>
    %133 = vector.shape_cast %132 : vector<1x2x256xf32> to vector<2x256xf32>
    %134 = vector.shape_cast %133 : vector<2x256xf32> to vector<1x2x256xf32>
    %135 = arith.mulf %131, %134 : vector<1x2x256xf32>
    %136 = arith.addf %130, %135 : vector<1x2x256xf32>
    %c19_i32 = arith.constant 19 : i32
    %137 = tpu.dynamic_rotate %51 by %c19_i32 dim 2 : vector<1x2x256xf32>, i32 -> vector<1x2x256xf32>
    %c14 = arith.constant 14 : index
    %c0_58 = arith.constant 0 : index
    %c0_59 = arith.constant 0 : index
    %138 = vector.load %arg3[%c14, %c0_58, %c0_59] : memref<49x2x256xf32, #tpu.memory_space<vmem>>, vector<1x2x256xf32>
    %139 = vector.shape_cast %138 : vector<1x2x256xf32> to vector<2x256xf32>
    %140 = vector.shape_cast %139 : vector<2x256xf32> to vector<1x2x256xf32>
    %141 = arith.mulf %137, %140 : vector<1x2x256xf32>
    %142 = arith.addf %136, %141 : vector<1x2x256xf32>
    %c18_i32 = arith.constant 18 : i32
    %143 = tpu.dynamic_rotate %51 by %c18_i32 dim 2 : vector<1x2x256xf32>, i32 -> vector<1x2x256xf32>
    %c15 = arith.constant 15 : index
    %c0_60 = arith.constant 0 : index
    %c0_61 = arith.constant 0 : index
    %144 = vector.load %arg3[%c15, %c0_60, %c0_61] : memref<49x2x256xf32, #tpu.memory_space<vmem>>, vector<1x2x256xf32>
    %145 = vector.shape_cast %144 : vector<1x2x256xf32> to vector<2x256xf32>
    %146 = vector.shape_cast %145 : vector<2x256xf32> to vector<1x2x256xf32>
    %147 = arith.mulf %143, %146 : vector<1x2x256xf32>
    %148 = arith.addf %142, %147 : vector<1x2x256xf32>
    %c17_i32 = arith.constant 17 : i32
    %149 = tpu.dynamic_rotate %51 by %c17_i32 dim 2 : vector<1x2x256xf32>, i32 -> vector<1x2x256xf32>
    %c16 = arith.constant 16 : index
    %c0_62 = arith.constant 0 : index
    %c0_63 = arith.constant 0 : index
    %150 = vector.load %arg3[%c16, %c0_62, %c0_63] : memref<49x2x256xf32, #tpu.memory_space<vmem>>, vector<1x2x256xf32>
    %151 = vector.shape_cast %150 : vector<1x2x256xf32> to vector<2x256xf32>
    %152 = vector.shape_cast %151 : vector<2x256xf32> to vector<1x2x256xf32>
    %153 = arith.mulf %149, %152 : vector<1x2x256xf32>
    %154 = arith.addf %148, %153 : vector<1x2x256xf32>
    %c16_i32 = arith.constant 16 : i32
    %155 = tpu.dynamic_rotate %51 by %c16_i32 dim 2 : vector<1x2x256xf32>, i32 -> vector<1x2x256xf32>
    %c17 = arith.constant 17 : index
    %c0_64 = arith.constant 0 : index
    %c0_65 = arith.constant 0 : index
    %156 = vector.load %arg3[%c17, %c0_64, %c0_65] : memref<49x2x256xf32, #tpu.memory_space<vmem>>, vector<1x2x256xf32>
    %157 = vector.shape_cast %156 : vector<1x2x256xf32> to vector<2x256xf32>
    %158 = vector.shape_cast %157 : vector<2x256xf32> to vector<1x2x256xf32>
    %159 = arith.mulf %155, %158 : vector<1x2x256xf32>
    %160 = arith.addf %154, %159 : vector<1x2x256xf32>
    %c15_i32 = arith.constant 15 : i32
    %161 = tpu.dynamic_rotate %51 by %c15_i32 dim 2 : vector<1x2x256xf32>, i32 -> vector<1x2x256xf32>
    %c18 = arith.constant 18 : index
    %c0_66 = arith.constant 0 : index
    %c0_67 = arith.constant 0 : index
    %162 = vector.load %arg3[%c18, %c0_66, %c0_67] : memref<49x2x256xf32, #tpu.memory_space<vmem>>, vector<1x2x256xf32>
    %163 = vector.shape_cast %162 : vector<1x2x256xf32> to vector<2x256xf32>
    %164 = vector.shape_cast %163 : vector<2x256xf32> to vector<1x2x256xf32>
    %165 = arith.mulf %161, %164 : vector<1x2x256xf32>
    %166 = arith.addf %160, %165 : vector<1x2x256xf32>
    %c14_i32 = arith.constant 14 : i32
    %167 = tpu.dynamic_rotate %51 by %c14_i32 dim 2 : vector<1x2x256xf32>, i32 -> vector<1x2x256xf32>
    %c19 = arith.constant 19 : index
    %c0_68 = arith.constant 0 : index
    %c0_69 = arith.constant 0 : index
    %168 = vector.load %arg3[%c19, %c0_68, %c0_69] : memref<49x2x256xf32, #tpu.memory_space<vmem>>, vector<1x2x256xf32>
    %169 = vector.shape_cast %168 : vector<1x2x256xf32> to vector<2x256xf32>
    %170 = vector.shape_cast %169 : vector<2x256xf32> to vector<1x2x256xf32>
    %171 = arith.mulf %167, %170 : vector<1x2x256xf32>
    %172 = arith.addf %166, %171 : vector<1x2x256xf32>
    %c13_i32 = arith.constant 13 : i32
    %173 = tpu.dynamic_rotate %51 by %c13_i32 dim 2 : vector<1x2x256xf32>, i32 -> vector<1x2x256xf32>
    %c20 = arith.constant 20 : index
    %c0_70 = arith.constant 0 : index
    %c0_71 = arith.constant 0 : index
    %174 = vector.load %arg3[%c20, %c0_70, %c0_71] : memref<49x2x256xf32, #tpu.memory_space<vmem>>, vector<1x2x256xf32>
    %175 = vector.shape_cast %174 : vector<1x2x256xf32> to vector<2x256xf32>
    %176 = vector.shape_cast %175 : vector<2x256xf32> to vector<1x2x256xf32>
    %177 = arith.mulf %173, %176 : vector<1x2x256xf32>
    %178 = arith.addf %172, %177 : vector<1x2x256xf32>
    %c3_i32 = arith.constant 3 : i32
    %179 = tpu.dynamic_rotate %51 by %c3_i32 dim 2 : vector<1x2x256xf32>, i32 -> vector<1x2x256xf32>
    %c21 = arith.constant 21 : index
    %c0_72 = arith.constant 0 : index
    %c0_73 = arith.constant 0 : index
    %180 = vector.load %arg3[%c21, %c0_72, %c0_73] : memref<49x2x256xf32, #tpu.memory_space<vmem>>, vector<1x2x256xf32>
    %181 = vector.shape_cast %180 : vector<1x2x256xf32> to vector<2x256xf32>
    %182 = vector.shape_cast %181 : vector<2x256xf32> to vector<1x2x256xf32>
    %183 = arith.mulf %179, %182 : vector<1x2x256xf32>
    %184 = arith.addf %178, %183 : vector<1x2x256xf32>
    %c2_i32 = arith.constant 2 : i32
    %185 = tpu.dynamic_rotate %51 by %c2_i32 dim 2 : vector<1x2x256xf32>, i32 -> vector<1x2x256xf32>
    %c22 = arith.constant 22 : index
    %c0_74 = arith.constant 0 : index
    %c0_75 = arith.constant 0 : index
    %186 = vector.load %arg3[%c22, %c0_74, %c0_75] : memref<49x2x256xf32, #tpu.memory_space<vmem>>, vector<1x2x256xf32>
    %187 = vector.shape_cast %186 : vector<1x2x256xf32> to vector<2x256xf32>
    %188 = vector.shape_cast %187 : vector<2x256xf32> to vector<1x2x256xf32>
    %189 = arith.mulf %185, %188 : vector<1x2x256xf32>
    %190 = arith.addf %184, %189 : vector<1x2x256xf32>
    %c1_i32 = arith.constant 1 : i32
    %191 = tpu.dynamic_rotate %51 by %c1_i32 dim 2 : vector<1x2x256xf32>, i32 -> vector<1x2x256xf32>
    %c23 = arith.constant 23 : index
    %c0_76 = arith.constant 0 : index
    %c0_77 = arith.constant 0 : index
    %192 = vector.load %arg3[%c23, %c0_76, %c0_77] : memref<49x2x256xf32, #tpu.memory_space<vmem>>, vector<1x2x256xf32>
    %193 = vector.shape_cast %192 : vector<1x2x256xf32> to vector<2x256xf32>
    %194 = vector.shape_cast %193 : vector<2x256xf32> to vector<1x2x256xf32>
    %195 = arith.mulf %191, %194 : vector<1x2x256xf32>
    %196 = arith.addf %190, %195 : vector<1x2x256xf32>
    %c24 = arith.constant 24 : index
    %c0_78 = arith.constant 0 : index
    %c0_79 = arith.constant 0 : index
    %197 = vector.load %arg3[%c24, %c0_78, %c0_79] : memref<49x2x256xf32, #tpu.memory_space<vmem>>, vector<1x2x256xf32>
    %198 = vector.shape_cast %197 : vector<1x2x256xf32> to vector<2x256xf32>
    %199 = vector.shape_cast %198 : vector<2x256xf32> to vector<1x2x256xf32>
    %200 = arith.mulf %51, %199 : vector<1x2x256xf32>
    %201 = arith.addf %196, %200 : vector<1x2x256xf32>
    %c255_i32 = arith.constant 255 : i32
    %202 = tpu.dynamic_rotate %51 by %c255_i32 dim 2 : vector<1x2x256xf32>, i32 -> vector<1x2x256xf32>
    %c25 = arith.constant 25 : index
    %c0_80 = arith.constant 0 : index
    %c0_81 = arith.constant 0 : index
    %203 = vector.load %arg3[%c25, %c0_80, %c0_81] : memref<49x2x256xf32, #tpu.memory_space<vmem>>, vector<1x2x256xf32>
    %204 = vector.shape_cast %203 : vector<1x2x256xf32> to vector<2x256xf32>
    %205 = vector.shape_cast %204 : vector<2x256xf32> to vector<1x2x256xf32>
    %206 = arith.mulf %202, %205 : vector<1x2x256xf32>
    %207 = arith.addf %201, %206 : vector<1x2x256xf32>
    %c254_i32 = arith.constant 254 : i32
    %208 = tpu.dynamic_rotate %51 by %c254_i32 dim 2 : vector<1x2x256xf32>, i32 -> vector<1x2x256xf32>
    %c26 = arith.constant 26 : index
    %c0_82 = arith.constant 0 : index
    %c0_83 = arith.constant 0 : index
    %209 = vector.load %arg3[%c26, %c0_82, %c0_83] : memref<49x2x256xf32, #tpu.memory_space<vmem>>, vector<1x2x256xf32>
    %210 = vector.shape_cast %209 : vector<1x2x256xf32> to vector<2x256xf32>
    %211 = vector.shape_cast %210 : vector<2x256xf32> to vector<1x2x256xf32>
    %212 = arith.mulf %208, %211 : vector<1x2x256xf32>
    %213 = arith.addf %207, %212 : vector<1x2x256xf32>
    %c253_i32 = arith.constant 253 : i32
    %214 = tpu.dynamic_rotate %51 by %c253_i32 dim 2 : vector<1x2x256xf32>, i32 -> vector<1x2x256xf32>
    %c27 = arith.constant 27 : index
    %c0_84 = arith.constant 0 : index
    %c0_85 = arith.constant 0 : index
    %215 = vector.load %arg3[%c27, %c0_84, %c0_85] : memref<49x2x256xf32, #tpu.memory_space<vmem>>, vector<1x2x256xf32>
    %216 = vector.shape_cast %215 : vector<1x2x256xf32> to vector<2x256xf32>
    %217 = vector.shape_cast %216 : vector<2x256xf32> to vector<1x2x256xf32>
    %218 = arith.mulf %214, %217 : vector<1x2x256xf32>
    %219 = arith.addf %213, %218 : vector<1x2x256xf32>
    %c243_i32 = arith.constant 243 : i32
    %220 = tpu.dynamic_rotate %51 by %c243_i32 dim 2 : vector<1x2x256xf32>, i32 -> vector<1x2x256xf32>
    %c28 = arith.constant 28 : index
    %c0_86 = arith.constant 0 : index
    %c0_87 = arith.constant 0 : index
    %221 = vector.load %arg3[%c28, %c0_86, %c0_87] : memref<49x2x256xf32, #tpu.memory_space<vmem>>, vector<1x2x256xf32>
    %222 = vector.shape_cast %221 : vector<1x2x256xf32> to vector<2x256xf32>
    %223 = vector.shape_cast %222 : vector<2x256xf32> to vector<1x2x256xf32>
    %224 = arith.mulf %220, %223 : vector<1x2x256xf32>
    %225 = arith.addf %219, %224 : vector<1x2x256xf32>
    %c242_i32 = arith.constant 242 : i32
    %226 = tpu.dynamic_rotate %51 by %c242_i32 dim 2 : vector<1x2x256xf32>, i32 -> vector<1x2x256xf32>
    %c29 = arith.constant 29 : index
    %c0_88 = arith.constant 0 : index
    %c0_89 = arith.constant 0 : index
    %227 = vector.load %arg3[%c29, %c0_88, %c0_89] : memref<49x2x256xf32, #tpu.memory_space<vmem>>, vector<1x2x256xf32>
    %228 = vector.shape_cast %227 : vector<1x2x256xf32> to vector<2x256xf32>
    %229 = vector.shape_cast %228 : vector<2x256xf32> to vector<1x2x256xf32>
    %230 = arith.mulf %226, %229 : vector<1x2x256xf32>
    %231 = arith.addf %225, %230 : vector<1x2x256xf32>
    %c241_i32 = arith.constant 241 : i32
    %232 = tpu.dynamic_rotate %51 by %c241_i32 dim 2 : vector<1x2x256xf32>, i32 -> vector<1x2x256xf32>
    %c30 = arith.constant 30 : index
    %c0_90 = arith.constant 0 : index
    %c0_91 = arith.constant 0 : index
    %233 = vector.load %arg3[%c30, %c0_90, %c0_91] : memref<49x2x256xf32, #tpu.memory_space<vmem>>, vector<1x2x256xf32>
    %234 = vector.shape_cast %233 : vector<1x2x256xf32> to vector<2x256xf32>
    %235 = vector.shape_cast %234 : vector<2x256xf32> to vector<1x2x256xf32>
    %236 = arith.mulf %232, %235 : vector<1x2x256xf32>
    %237 = arith.addf %231, %236 : vector<1x2x256xf32>
    %c240_i32 = arith.constant 240 : i32
    %238 = tpu.dynamic_rotate %51 by %c240_i32 dim 2 : vector<1x2x256xf32>, i32 -> vector<1x2x256xf32>
    %c31 = arith.constant 31 : index
    %c0_92 = arith.constant 0 : index
    %c0_93 = arith.constant 0 : index
    %239 = vector.load %arg3[%c31, %c0_92, %c0_93] : memref<49x2x256xf32, #tpu.memory_space<vmem>>, vector<1x2x256xf32>
    %240 = vector.shape_cast %239 : vector<1x2x256xf32> to vector<2x256xf32>
    %241 = vector.shape_cast %240 : vector<2x256xf32> to vector<1x2x256xf32>
    %242 = arith.mulf %238, %241 : vector<1x2x256xf32>
    %243 = arith.addf %237, %242 : vector<1x2x256xf32>
    %c239_i32 = arith.constant 239 : i32
    %244 = tpu.dynamic_rotate %51 by %c239_i32 dim 2 : vector<1x2x256xf32>, i32 -> vector<1x2x256xf32>
    %c32 = arith.constant 32 : index
    %c0_94 = arith.constant 0 : index
    %c0_95 = arith.constant 0 : index
    %245 = vector.load %arg3[%c32, %c0_94, %c0_95] : memref<49x2x256xf32, #tpu.memory_space<vmem>>, vector<1x2x256xf32>
    %246 = vector.shape_cast %245 : vector<1x2x256xf32> to vector<2x256xf32>
    %247 = vector.shape_cast %246 : vector<2x256xf32> to vector<1x2x256xf32>
    %248 = arith.mulf %244, %247 : vector<1x2x256xf32>
    %249 = arith.addf %243, %248 : vector<1x2x256xf32>
    %c238_i32 = arith.constant 238 : i32
    %250 = tpu.dynamic_rotate %51 by %c238_i32 dim 2 : vector<1x2x256xf32>, i32 -> vector<1x2x256xf32>
    %c33 = arith.constant 33 : index
    %c0_96 = arith.constant 0 : index
    %c0_97 = arith.constant 0 : index
    %251 = vector.load %arg3[%c33, %c0_96, %c0_97] : memref<49x2x256xf32, #tpu.memory_space<vmem>>, vector<1x2x256xf32>
    %252 = vector.shape_cast %251 : vector<1x2x256xf32> to vector<2x256xf32>
    %253 = vector.shape_cast %252 : vector<2x256xf32> to vector<1x2x256xf32>
    %254 = arith.mulf %250, %253 : vector<1x2x256xf32>
    %255 = arith.addf %249, %254 : vector<1x2x256xf32>
    %c237_i32 = arith.constant 237 : i32
    %256 = tpu.dynamic_rotate %51 by %c237_i32 dim 2 : vector<1x2x256xf32>, i32 -> vector<1x2x256xf32>
    %c34 = arith.constant 34 : index
    %c0_98 = arith.constant 0 : index
    %c0_99 = arith.constant 0 : index
    %257 = vector.load %arg3[%c34, %c0_98, %c0_99] : memref<49x2x256xf32, #tpu.memory_space<vmem>>, vector<1x2x256xf32>
    %258 = vector.shape_cast %257 : vector<1x2x256xf32> to vector<2x256xf32>
    %259 = vector.shape_cast %258 : vector<2x256xf32> to vector<1x2x256xf32>
    %260 = arith.mulf %256, %259 : vector<1x2x256xf32>
    %261 = arith.addf %255, %260 : vector<1x2x256xf32>
    %c227_i32 = arith.constant 227 : i32
    %262 = tpu.dynamic_rotate %51 by %c227_i32 dim 2 : vector<1x2x256xf32>, i32 -> vector<1x2x256xf32>
    %c35 = arith.constant 35 : index
    %c0_100 = arith.constant 0 : index
    %c0_101 = arith.constant 0 : index
    %263 = vector.load %arg3[%c35, %c0_100, %c0_101] : memref<49x2x256xf32, #tpu.memory_space<vmem>>, vector<1x2x256xf32>
    %264 = vector.shape_cast %263 : vector<1x2x256xf32> to vector<2x256xf32>
    %265 = vector.shape_cast %264 : vector<2x256xf32> to vector<1x2x256xf32>
    %266 = arith.mulf %262, %265 : vector<1x2x256xf32>
    %267 = arith.addf %261, %266 : vector<1x2x256xf32>
    %c226_i32 = arith.constant 226 : i32
    %268 = tpu.dynamic_rotate %51 by %c226_i32 dim 2 : vector<1x2x256xf32>, i32 -> vector<1x2x256xf32>
    %c36 = arith.constant 36 : index
    %c0_102 = arith.constant 0 : index
    %c0_103 = arith.constant 0 : index
    %269 = vector.load %arg3[%c36, %c0_102, %c0_103] : memref<49x2x256xf32, #tpu.memory_space<vmem>>, vector<1x2x256xf32>
    %270 = vector.shape_cast %269 : vector<1x2x256xf32> to vector<2x256xf32>
    %271 = vector.shape_cast %270 : vector<2x256xf32> to vector<1x2x256xf32>
    %272 = arith.mulf %268, %271 : vector<1x2x256xf32>
    %273 = arith.addf %267, %272 : vector<1x2x256xf32>
    %c225_i32 = arith.constant 225 : i32
    %274 = tpu.dynamic_rotate %51 by %c225_i32 dim 2 : vector<1x2x256xf32>, i32 -> vector<1x2x256xf32>
    %c37 = arith.constant 37 : index
    %c0_104 = arith.constant 0 : index
    %c0_105 = arith.constant 0 : index
    %275 = vector.load %arg3[%c37, %c0_104, %c0_105] : memref<49x2x256xf32, #tpu.memory_space<vmem>>, vector<1x2x256xf32>
    %276 = vector.shape_cast %275 : vector<1x2x256xf32> to vector<2x256xf32>
    %277 = vector.shape_cast %276 : vector<2x256xf32> to vector<1x2x256xf32>
    %278 = arith.mulf %274, %277 : vector<1x2x256xf32>
    %279 = arith.addf %273, %278 : vector<1x2x256xf32>
    %c224_i32 = arith.constant 224 : i32
    %280 = tpu.dynamic_rotate %51 by %c224_i32 dim 2 : vector<1x2x256xf32>, i32 -> vector<1x2x256xf32>
    %c38 = arith.constant 38 : index
    %c0_106 = arith.constant 0 : index
    %c0_107 = arith.constant 0 : index
    %281 = vector.load %arg3[%c38, %c0_106, %c0_107] : memref<49x2x256xf32, #tpu.memory_space<vmem>>, vector<1x2x256xf32>
    %282 = vector.shape_cast %281 : vector<1x2x256xf32> to vector<2x256xf32>
    %283 = vector.shape_cast %282 : vector<2x256xf32> to vector<1x2x256xf32>
    %284 = arith.mulf %280, %283 : vector<1x2x256xf32>
    %285 = arith.addf %279, %284 : vector<1x2x256xf32>
    %c223_i32 = arith.constant 223 : i32
    %286 = tpu.dynamic_rotate %51 by %c223_i32 dim 2 : vector<1x2x256xf32>, i32 -> vector<1x2x256xf32>
    %c39 = arith.constant 39 : index
    %c0_108 = arith.constant 0 : index
    %c0_109 = arith.constant 0 : index
    %287 = vector.load %arg3[%c39, %c0_108, %c0_109] : memref<49x2x256xf32, #tpu.memory_space<vmem>>, vector<1x2x256xf32>
    %288 = vector.shape_cast %287 : vector<1x2x256xf32> to vector<2x256xf32>
    %289 = vector.shape_cast %288 : vector<2x256xf32> to vector<1x2x256xf32>
    %290 = arith.mulf %286, %289 : vector<1x2x256xf32>
    %291 = arith.addf %285, %290 : vector<1x2x256xf32>
    %c222_i32 = arith.constant 222 : i32
    %292 = tpu.dynamic_rotate %51 by %c222_i32 dim 2 : vector<1x2x256xf32>, i32 -> vector<1x2x256xf32>
    %c40 = arith.constant 40 : index
    %c0_110 = arith.constant 0 : index
    %c0_111 = arith.constant 0 : index
    %293 = vector.load %arg3[%c40, %c0_110, %c0_111] : memref<49x2x256xf32, #tpu.memory_space<vmem>>, vector<1x2x256xf32>
    %294 = vector.shape_cast %293 : vector<1x2x256xf32> to vector<2x256xf32>
    %295 = vector.shape_cast %294 : vector<2x256xf32> to vector<1x2x256xf32>
    %296 = arith.mulf %292, %295 : vector<1x2x256xf32>
    %297 = arith.addf %291, %296 : vector<1x2x256xf32>
    %c221_i32 = arith.constant 221 : i32
    %298 = tpu.dynamic_rotate %51 by %c221_i32 dim 2 : vector<1x2x256xf32>, i32 -> vector<1x2x256xf32>
    %c41 = arith.constant 41 : index
    %c0_112 = arith.constant 0 : index
    %c0_113 = arith.constant 0 : index
    %299 = vector.load %arg3[%c41, %c0_112, %c0_113] : memref<49x2x256xf32, #tpu.memory_space<vmem>>, vector<1x2x256xf32>
    %300 = vector.shape_cast %299 : vector<1x2x256xf32> to vector<2x256xf32>
    %301 = vector.shape_cast %300 : vector<2x256xf32> to vector<1x2x256xf32>
    %302 = arith.mulf %298, %301 : vector<1x2x256xf32>
    %303 = arith.addf %297, %302 : vector<1x2x256xf32>
    %c211_i32 = arith.constant 211 : i32
    %304 = tpu.dynamic_rotate %51 by %c211_i32 dim 2 : vector<1x2x256xf32>, i32 -> vector<1x2x256xf32>
    %c42 = arith.constant 42 : index
    %c0_114 = arith.constant 0 : index
    %c0_115 = arith.constant 0 : index
    %305 = vector.load %arg3[%c42, %c0_114, %c0_115] : memref<49x2x256xf32, #tpu.memory_space<vmem>>, vector<1x2x256xf32>
    %306 = vector.shape_cast %305 : vector<1x2x256xf32> to vector<2x256xf32>
    %307 = vector.shape_cast %306 : vector<2x256xf32> to vector<1x2x256xf32>
    %308 = arith.mulf %304, %307 : vector<1x2x256xf32>
    %309 = arith.addf %303, %308 : vector<1x2x256xf32>
    %c210_i32 = arith.constant 210 : i32
    %310 = tpu.dynamic_rotate %51 by %c210_i32 dim 2 : vector<1x2x256xf32>, i32 -> vector<1x2x256xf32>
    %c43 = arith.constant 43 : index
    %c0_116 = arith.constant 0 : index
    %c0_117 = arith.constant 0 : index
    %311 = vector.load %arg3[%c43, %c0_116, %c0_117] : memref<49x2x256xf32, #tpu.memory_space<vmem>>, vector<1x2x256xf32>
    %312 = vector.shape_cast %311 : vector<1x2x256xf32> to vector<2x256xf32>
    %313 = vector.shape_cast %312 : vector<2x256xf32> to vector<1x2x256xf32>
    %314 = arith.mulf %310, %313 : vector<1x2x256xf32>
    %315 = arith.addf %309, %314 : vector<1x2x256xf32>
    %c209_i32 = arith.constant 209 : i32
    %316 = tpu.dynamic_rotate %51 by %c209_i32 dim 2 : vector<1x2x256xf32>, i32 -> vector<1x2x256xf32>
    %c44 = arith.constant 44 : index
    %c0_118 = arith.constant 0 : index
    %c0_119 = arith.constant 0 : index
    %317 = vector.load %arg3[%c44, %c0_118, %c0_119] : memref<49x2x256xf32, #tpu.memory_space<vmem>>, vector<1x2x256xf32>
    %318 = vector.shape_cast %317 : vector<1x2x256xf32> to vector<2x256xf32>
    %319 = vector.shape_cast %318 : vector<2x256xf32> to vector<1x2x256xf32>
    %320 = arith.mulf %316, %319 : vector<1x2x256xf32>
    %321 = arith.addf %315, %320 : vector<1x2x256xf32>
    %c208_i32 = arith.constant 208 : i32
    %322 = tpu.dynamic_rotate %51 by %c208_i32 dim 2 : vector<1x2x256xf32>, i32 -> vector<1x2x256xf32>
    %c45 = arith.constant 45 : index
    %c0_120 = arith.constant 0 : index
    %c0_121 = arith.constant 0 : index
    %323 = vector.load %arg3[%c45, %c0_120, %c0_121] : memref<49x2x256xf32, #tpu.memory_space<vmem>>, vector<1x2x256xf32>
    %324 = vector.shape_cast %323 : vector<1x2x256xf32> to vector<2x256xf32>
    %325 = vector.shape_cast %324 : vector<2x256xf32> to vector<1x2x256xf32>
    %326 = arith.mulf %322, %325 : vector<1x2x256xf32>
    %327 = arith.addf %321, %326 : vector<1x2x256xf32>
    %c207_i32 = arith.constant 207 : i32
    %328 = tpu.dynamic_rotate %51 by %c207_i32 dim 2 : vector<1x2x256xf32>, i32 -> vector<1x2x256xf32>
    %c46 = arith.constant 46 : index
    %c0_122 = arith.constant 0 : index
    %c0_123 = arith.constant 0 : index
    %329 = vector.load %arg3[%c46, %c0_122, %c0_123] : memref<49x2x256xf32, #tpu.memory_space<vmem>>, vector<1x2x256xf32>
    %330 = vector.shape_cast %329 : vector<1x2x256xf32> to vector<2x256xf32>
    %331 = vector.shape_cast %330 : vector<2x256xf32> to vector<1x2x256xf32>
    %332 = arith.mulf %328, %331 : vector<1x2x256xf32>
    %333 = arith.addf %327, %332 : vector<1x2x256xf32>
    %c206_i32 = arith.constant 206 : i32
    %334 = tpu.dynamic_rotate %51 by %c206_i32 dim 2 : vector<1x2x256xf32>, i32 -> vector<1x2x256xf32>
    %c47 = arith.constant 47 : index
    %c0_124 = arith.constant 0 : index
    %c0_125 = arith.constant 0 : index
    %335 = vector.load %arg3[%c47, %c0_124, %c0_125] : memref<49x2x256xf32, #tpu.memory_space<vmem>>, vector<1x2x256xf32>
    %336 = vector.shape_cast %335 : vector<1x2x256xf32> to vector<2x256xf32>
    %337 = vector.shape_cast %336 : vector<2x256xf32> to vector<1x2x256xf32>
    %338 = arith.mulf %334, %337 : vector<1x2x256xf32>
    %339 = arith.addf %333, %338 : vector<1x2x256xf32>
    %c205_i32 = arith.constant 205 : i32
    %340 = tpu.dynamic_rotate %51 by %c205_i32 dim 2 : vector<1x2x256xf32>, i32 -> vector<1x2x256xf32>
    %c48 = arith.constant 48 : index
    %c0_126 = arith.constant 0 : index
    %c0_127 = arith.constant 0 : index
    %341 = vector.load %arg3[%c48, %c0_126, %c0_127] : memref<49x2x256xf32, #tpu.memory_space<vmem>>, vector<1x2x256xf32>
    %342 = vector.shape_cast %341 : vector<1x2x256xf32> to vector<2x256xf32>
    %343 = vector.shape_cast %342 : vector<2x256xf32> to vector<1x2x256xf32>
    %344 = arith.mulf %340, %343 : vector<1x2x256xf32>
    %345 = arith.addf %339, %344 : vector<1x2x256xf32>
    %cst_128 = arith.constant dense<0.000000e+00> : vector<1x256xf32>
    %346 = vector.multi_reduction <add>, %345, %cst_128 [1] : vector<1x2x256xf32> to vector<1x256xf32>
    %347 = vector.shape_cast %346 : vector<1x256xf32> to vector<1x1x256xf32>
    %348 = arith.negf %347 : vector<1x1x256xf32>
    %349 = math.exp %348 : vector<1x1x256xf32>
    %cst_129 = arith.constant 1.000000e+00 : f32
    %350 = vector.broadcast %cst_129 : f32 to vector<1x1x256xf32>
    %351 = arith.addf %350, %349 : vector<1x1x256xf32>
    %352 = arith.divf %350, %351 : vector<1x1x256xf32>
    %c0_130 = arith.constant 0 : index
    %c0_131 = arith.constant 0 : index
    %c0_132 = arith.constant 0 : index
    %353 = vector.load %arg6[%c0_130, %c0_131, %c0_132] : memref<1x32x256xf32, #tpu.memory_space<vmem>>, vector<1x32x256xf32>
    %354 = vector.broadcast %352 : vector<1x1x256xf32> to vector<1x32x256xf32>
    %355 = arith.mulf %354, %353 : vector<1x32x256xf32>
    %c0_133 = arith.constant 0 : index
    %c0_134 = arith.constant 0 : index
    %c0_135 = arith.constant 0 : index
    %356 = vector.load %arg5[%c0_133, %c0_134, %c0_135] : memref<1x32x256xf32, #tpu.memory_space<vmem>>, vector<1x32x256xf32>
    tpu.vector_store %arg5[%c0_133, %c0_134, %c0_135], %355 {strides = array<i32>} : memref<1x32x256xf32, #tpu.memory_space<vmem>>, vector<1x32x256xf32>,
    return
  }
  func.func @transform_0(%arg0: i32) -> (i32, i32, i32) {
    %c0_i32 = arith.constant 0 : i32
    %c0_i32_0 = arith.constant 0 : i32
    %c0_i32_1 = arith.constant 0 : i32
    %c0_i32_2 = arith.constant 0 : i32
    return %c0_i32, %c0_i32_0, %c0_i32_1 : i32, i32, i32
  }
  func.func @transform_1(%arg0: i32) -> (i32, i32, i32) {
    %c0_i32 = arith.constant 0 : i32
    %c0_i32_0 = arith.constant 0 : i32
    %c0_i32_1 = arith.constant 0 : i32
    %c0_i32_2 = arith.constant 0 : i32
    return %c0_i32, %c0_i32_0, %c0_i32_1 : i32, i32, i32
  }
  func.func @transform_2(%arg0: i32) -> (i32, i32, i32) {
    %c0_i32 = arith.constant 0 : i32
    %c0_i32_0 = arith.constant 0 : i32
    %c0_i32_1 = arith.constant 0 : i32
    %c0_i32_2 = arith.constant 0 : i32
    return %c0_i32, %c0_i32_0, %c0_i32_1 : i32, i32, i32
  }
  func.func @transform_3(%arg0: i32) -> (i32, i32, i32) {
    %c0_i32 = arith.constant 0 : i32
    %c0_i32_0 = arith.constant 0 : i32
    %c0_i32_1 = arith.constant 0 : i32
    return %arg0, %c0_i32, %c0_i32_0 : i32, i32, i32
  }
  func.func @transform_4(%arg0: i32) -> (i32, i32, i32) {
    %c0_i32 = arith.constant 0 : i32
    %c0_i32_0 = arith.constant 0 : i32
    %c0_i32_1 = arith.constant 0 : i32
    return %arg0, %c0_i32, %c0_i32_0 : i32, i32, i32
  }
}

</mosaic_0001>

<llo_original>
// kernel: tpu_custom_call.1
$region0: #{tpu_custom_call.1}
  #allocation0 [shape = 'u32[]', space=smem, size = 0x4, offset = 0x4, fixed_abs, tag = 'smem constant byte address 0x4 - core index']
  #allocation1 [shape = 'u32[72,128]{1,0:T(1,128)}', space=vmem, size = 0x9000, scoped, tag = 'internal scratch']
  #allocation2 [shape = 'f32[1,32,256]{2,1,0:T(8,128)}', space=vmem, size = 0x8000, scoped, tag = 'scratch operand']
  %s0 = inlined_call_operand.vmem [shape: f32[1,32,8], index: 0, kind: input, shape index: {}]
  %s1 = inlined_call_operand.vmem [shape: f32[1,32,8], index: 1, kind: input, shape index: {}]
  %s2 = inlined_call_operand.hbm [shape: f32[49,2,256], index: 2, kind: input, shape index: {}]
  %s3 = inlined_call_operand.hbm [shape: f32[2,32,256], index: 3, kind: input, shape index: {}]
  %s4 = inlined_call_operand.hbm [shape: f32[2,32,256], index: 4, kind: output, shape index: {}]
  %s5 = sld [smem:[#allocation0]]
  $region57: #{tpu_custom_call.1} parent=0
    _
  %s7 = ssub.s32 1, %s5
  %s8 = scalar_select 0, %s7, %s5
  $region1: #{tpu_custom_call.1} parent=0
    #allocation3 [shape = 'u8[100352]{0}', space=vmem, size = 0x18800, scoped, tag = 'input window, operand 2, single buffered']
    #allocation4 [shape = 's32[2]{0}', space=sflag, size = 0x8, scoped, tag = 'scoped memory for tpu_custom_call.1']
    #allocation5 [shape = 's32[2]{0}', space=sflag, size = 0x8, scoped, tag = 'scoped memory for tpu_custom_call.1']
    #allocation6 [shape = 'u8[65536]{0}', space=vmem, size = 0x10000, scoped, tag = 'input window, operand 3']
    #allocation7 [shape = 's32[2]{0}', space=sflag, size = 0x8, scoped, tag = 'scoped memory for tpu_custom_call.1']
    #allocation8 [shape = 'u8[65536]{0}', space=vmem, size = 0x10000, scoped, tag = 'output window, operand 0']
    %9 = vsyncpa [#allocation4], 0
    %10 = vsyncpa [#allocation7], 0
    %s11 = scalar_lea.sflag [#allocation7], 1
    %12 = vsyncpa %s11, 0
    %13 = vsyncpa [#allocation5], 0
    %s14 = scalar_lea.sflag [#allocation5], 1
    %15 = vsyncpa %s14, 0
    loop: start=0, step=1, limit=4
    $region2: #{tpu_custom_call.1} parent=1 // loop_pre_header
      _
    $region3: #{tpu_custom_call.1} parent=1 // loop_header
      %s17 = sphi 0, %s21
      %p18 = scmp.ge.s32.totalorder %s17, 4
      %s25 = sphi 0, %s25
      %s27 = sphi 0, %s25
      %s28 = sphi 0, %s27
      %s42 = sphi 0, %s28
      %s46 = sphi 0, %s46
      %s48 = sphi 0, %s46
      %s49 = sphi 0, %s48
      %s63 = sphi 0, %s49
      %s67 = sphi 0, %s67
      %s69 = sphi 0, %s67
      %s70 = sphi 0, %s69
      %s84 = sphi 0, %s70
      %s90 = sphi 0, %s92
      %s93 = sphi 0, %s90
      %s94 = sphi 0, %s93
      %s110 = sphi 0, %s94
      %s116 = sphi 0, %s118
      %s119 = sphi 0, %s116
      %s120 = sphi 0, %s119
      %s136 = sphi 0, %s120
    $region4: #{tpu_custom_call.1} parent=1 // loop_header_branch
      %20 = sbr.rel (%p18) target = $region8
    $region5: #{tpu_custom_call.1} parent=1 // loop_body
      %s22 = ssub.s32 %s17, 1
      %s23 = ssub.s32 %s17, 2
      %s24 = sadd.s32 %s17, 1
      %s26 = sadd.s32 %s25, 1
      %p29 = scmp.eq.s32.totalorder %s17, 1
      %p30 = scmp.ne.s32.totalorder %s25, %s27
      %p31 = scmp.eq.s32.totalorder %s17, 0
      %p32 = por %p30, %p31
      %p33 = scmp.ne.s32.totalorder %s25, %s27
      %p34 = scmp.eq.s32.totalorder %s22, 1
      %p35 = por %p33, %p34
      %p36 = scmp.ne.s32.totalorder %s27, %s28
      %p37 = scmp.eq.s32.totalorder %s22, 0
      %p38 = por %p36, %p37
      %p39 = scmp.ne.s32.totalorder %s27, %s28
      %p40 = scmp.eq.s32.totalorder %s23, 1
      %p41 = por %p39, %p40
      %p43 = scmp.ne.s32.totalorder %s28, %s42
      %p44 = scmp.eq.s32.totalorder %s23, 0
      %p45 = por %p43, %p44
      %s47 = sadd.s32 %s46, 1
      %p50 = scmp.eq.s32.totalorder %s17, 1
      %p51 = scmp.ne.s32.totalorder %s46, %s48
      %p52 = scmp.eq.s32.totalorder %s17, 0
      %p53 = por %p51, %p52
      %p54 = scmp.ne.s32.totalorder %s46, %s48
      %p55 = scmp.eq.s32.totalorder %s22, 1
      %p56 = por %p54, %p55
      %p57 = scmp.ne.s32.totalorder %s48, %s49
      %p58 = scmp.eq.s32.totalorder %s22, 0
      %p59 = por %p57, %p58
      %p60 = scmp.ne.s32.totalorder %s48, %s49
      %p61 = scmp.eq.s32.totalorder %s23, 1
      %p62 = por %p60, %p61
      %p64 = scmp.ne.s32.totalorder %s49, %s63
      %p65 = scmp.eq.s32.totalorder %s23, 0
      %p66 = por %p64, %p65
      %s68 = sadd.s32 %s67, 1
      %p71 = scmp.eq.s32.totalorder %s17, 1
      %p72 = scmp.ne.s32.totalorder %s67, %s69
      %p73 = scmp.eq.s32.totalorder %s17, 0
      %p74 = por %p72, %p73
      %p75 = scmp.ne.s32.totalorder %s67, %s69
      %p76 = scmp.eq.s32.totalorder %s22, 1
      %p77 = por %p75, %p76
      %p78 = scmp.ne.s32.totalorder %s69, %s70
      %p79 = scmp.eq.s32.totalorder %s22, 0
      %p80 = por %p78, %p79
      %p81 = scmp.ne.s32.totalorder %s69, %s70
      %p82 = scmp.eq.s32.totalorder %s23, 1
      %p83 = por %p81, %p82
      %p85 = scmp.ne.s32.totalorder %s70, %s84
      %p86 = scmp.eq.s32.totalorder %s23, 0
      %p87 = por %p85, %p86
      %s88 = ssub.s32 %s17, %s24
      %p89 = scmp.eq.s32.totalorder %s88, 0
      %s91 = sadd.s32 %s90, 1
      %s92 = scalar_select %p89, %s90, %s91
      %p95 = pneg %p89
      %p96 = scmp.eq.s32.totalorder %s17, 1
      %p97 = por %p95, %p96
      %p98 = scmp.ne.s32.totalorder %s90, %s93
      %p99 = scmp.eq.s32.totalorder %s17, 0
      %p100 = por %p98, %p99
      %p101 = scmp.ne.s32.totalorder %s90, %s93
      %p102 = scmp.eq.s32.totalorder %s22, 1
      %p103 = por %p101, %p102
      %p104 = scmp.ne.s32.totalorder %s93, %s94
      %p105 = scmp.eq.s32.totalorder %s22, 0
      %p106 = por %p104, %p105
      %p107 = scmp.ne.s32.totalorder %s93, %s94
      %p108 = scmp.eq.s32.totalorder %s23, 1
      %p109 = por %p107, %p108
      %p111 = scmp.ne.s32.totalorder %s94, %s110
      %p112 = scmp.eq.s32.totalorder %s23, 0
      %p113 = por %p111, %p112
      %s114 = ssub.s32 %s17, %s24
      %p115 = scmp.eq.s32.totalorder %s114, 0
      %s117 = sadd.s32 %s116, 1
      %s118 = scalar_select %p115, %s116, %s117
      %p121 = pneg %p115
      %p122 = scmp.eq.s32.totalorder %s17, 1
      %p123 = por %p121, %p122
      %p124 = scmp.ne.s32.totalorder %s116, %s119
      %p125 = scmp.eq.s32.totalorder %s17, 0
      %p126 = por %p124, %p125
      %p127 = scmp.ne.s32.totalorder %s116, %s119
      %p128 = scmp.eq.s32.totalorder %s22, 1
      %p129 = por %p127, %p128
      %p130 = scmp.ne.s32.totalorder %s119, %s120
      %p131 = scmp.eq.s32.totalorder %s22, 0
      %p132 = por %p130, %p131
      %p133 = scmp.ne.s32.totalorder %s119, %s120
      %p134 = scmp.eq.s32.totalorder %s23, 1
      %p135 = por %p133, %p134
      %p137 = scmp.ne.s32.totalorder %s120, %s136
      %p138 = scmp.eq.s32.totalorder %s23, 0
      %p139 = por %p137, %p138
      %p140 = scmp.le.s32.totalorder 1, %s17
      %p141 = scmp.lt.s32.totalorder %s17, 3
      %p142 = pnand %p140, %p141
      %p143 = pneg %p142
      // Predicated region
      $region9: #{tpu_custom_call.1} parent=5 // pred_check
        _
      $region10: #{tpu_custom_call.1} parent=5 // pred_check_branch
        %145 = sbr.rel (%p142) target = $region12
      $region11: #{tpu_custom_call.1} parent=5 // pred_region
        %s146 = ssub.s32 %s17, 1
        // Predicated region
        $region13: #{tpu_custom_call.1} parent=11 // pred_check
          %p147 = pneg %p38
        $region14: #{tpu_custom_call.1} parent=11 // pred_check_branch
          %149 = sbr.rel (%p147) target = $region16
        $region15: #{tpu_custom_call.1} parent=11 // pred_region
          _
        $region16: #{tpu_custom_call.1} parent=11 // pred_fallthru
          _
        // Predicated region
        $region17: #{tpu_custom_call.1} parent=11 // pred_check
          %p150 = pneg %p59
        $region18: #{tpu_custom_call.1} parent=11 // pred_check_branch
          %152 = sbr.rel (%p150) target = $region20
        $region19: #{tpu_custom_call.1} parent=11 // pred_region
          _
        $region20: #{tpu_custom_call.1} parent=11 // pred_fallthru
          _
        // Predicated region
        $region21: #{tpu_custom_call.1} parent=11 // pred_check
          %p153 = pneg %p80
        $region22: #{tpu_custom_call.1} parent=11 // pred_check_branch
          %155 = sbr.rel (%p153) target = $region24
        $region23: #{tpu_custom_call.1} parent=11 // pred_region
          %157 = vsyncadd [#allocation4], 0
          %s158 = sshll.u32 %s2, 4
          %s159 = int_to_ptr.hbm [resolvable:$true] %s158
          %s160 = sshll.u32 [#allocation3], 4
          %s161 = int_to_ptr.vmem [resolvable:$true] %s160
          %166 = dma.hbm_to_vmem [thread:$0]  %s159, 3136, %s161, [#allocation4], 64, 64, 4
        $region24: #{tpu_custom_call.1} parent=11 // pred_fallthru
          _
      $region12: #{tpu_custom_call.1} parent=5 // pred_fallthru
        _
      %p167 = scmp.lt.s32.totalorder %s17, 2
      // Predicated region
      $region25: #{tpu_custom_call.1} parent=5 // pred_check
        %p168 = pneg %p167
      $region26: #{tpu_custom_call.1} parent=5 // pred_check_branch
        %170 = sbr.rel (%p168) target = $region28
      $region27: #{tpu_custom_call.1} parent=5 // pred_region
        // Predicated region
        $region29: #{tpu_custom_call.1} parent=27 // pred_check
          %p171 = pneg %p100
        $region30: #{tpu_custom_call.1} parent=27 // pred_check_branch
          %173 = sbr.rel (%p171) target = $region32
        $region31: #{tpu_custom_call.1} parent=27 // pred_region
          %s174 = sand.u32 %s90, 1
          %s175 = scalar_lea.sflag [#allocation7], %s174
          %s176 = sand.u32 %s90, 1
          %s177 = smul.addr %s176, 64
          %s178 = scalar_lea.vmem [#allocation6], %s177
          %180 = vsyncadd %s175, 0
          %s181 = smul.addr %s17, 8
          %s182 = smul.addr %s181, 8
          %s183 = scalar_lea.hbm %s3, %s182
          %s184 = sshll.u32 %s183, 4
          %s185 = int_to_ptr.hbm [resolvable:$true] %s184
          %s186 = sshll.u32 %s178, 4
          %s187 = int_to_ptr.vmem [resolvable:$true] %s186
          %192 = dma.hbm_to_vmem [thread:$0]  %s185, 1024, %s187, %s175, 256, 256, 16
        $region32: #{tpu_custom_call.1} parent=27 // pred_fallthru
          _
      $region28: #{tpu_custom_call.1} parent=5 // pred_fallthru
        _
      %p193 = scmp.le.s32.totalorder 1, %s17
      %p194 = scmp.lt.s32.totalorder %s17, 3
      %p195 = pnand %p193, %p194
      %p196 = pneg %p195
      // Predicated region
      $region33: #{tpu_custom_call.1} parent=5 // pred_check
        _
      $region34: #{tpu_custom_call.1} parent=5 // pred_check_branch
        %198 = sbr.rel (%p195) target = $region36
      $region35: #{tpu_custom_call.1} parent=5 // pred_region
        %s199 = ssub.s32 %s17, 1
        // Predicated region
        $region37: #{tpu_custom_call.1} parent=35 // pred_check
          %p200 = pneg %p80
        $region38: #{tpu_custom_call.1} parent=35 // pred_check_branch
          %202 = sbr.rel (%p200) target = $region40
        $region39: #{tpu_custom_call.1} parent=35 // pred_region
          %204 = dma.done [#allocation4], 3136
        $region40: #{tpu_custom_call.1} parent=35 // pred_fallthru
          _
        %s205 = sand.u32 %s93, 1
        %s206 = scalar_lea.sflag [#allocation7], %s205
        %s207 = sand.u32 %s93, 1
        %s208 = smul.addr %s207, 64
        %s209 = scalar_lea.vmem [#allocation6], %s208
        // Predicated region
        $region41: #{tpu_custom_call.1} parent=35 // pred_check
          %p210 = pneg %p106
        $region42: #{tpu_custom_call.1} parent=35 // pred_check_branch
          %212 = sbr.rel (%p210) target = $region44
        $region43: #{tpu_custom_call.1} parent=35 // pred_region
          %214 = dma.done %s206, 1024
        $region44: #{tpu_custom_call.1} parent=35 // pred_fallthru
          _
        %p215 = pneg %p38
        %p216 = pneg %p35
        %p217 = pneg %p59
        %p218 = pneg %p56
        %p219 = pneg %p80
        %p220 = pneg %p77
        %s221 = sand.u32 %s93, 1
        %s222 = scalar_lea.sflag [#allocation7], %s221
        %s223 = sand.u32 %s93, 1
        %s224 = smul.addr %s223, 64
        %s225 = scalar_lea.vmem [#allocation6], %s224
        %p226 = pneg %p106
        %p227 = pneg %p103
        %p228 = pneg %p132
        %p229 = pneg %p129
        %s230 = sand.u32 %s119, 1
        %s231 = scalar_lea.sflag [#allocation5], %s230
        %s232 = sand.u32 %s119, 1
        %s233 = smul.addr %s232, 64
        %s234 = scalar_lea.vmem [#allocation8], %s233
        %v235 = vld [vmem:[%s209] sm:$0xff]
        %v236 = vld [vmem:[%s209 + $0x8] sm:$0xff]
        %v237 = vld [vmem:[%s209 + $0x10] sm:$0xff]
        %v238 = vld [vmem:[%s209 + $0x18] sm:$0xff]
        %v239 = vld [vmem:[%s209 + $0x20] sm:$0xff]
        %v240 = vld [vmem:[%s209 + $0x28] sm:$0xff]
        %v241 = vld [vmem:[%s209 + $0x30] sm:$0xff]
        %v242 = vld [vmem:[%s209 + $0x38] sm:$0xff]
        %v243 = vmax.f32 %v235, %v236
        %244 = vmax.xlane.f32.xlu0 %v243
        %v245 = vpop.xlane.xlu0 %244
        %v246 = vmax.f32 %v237, %v238
        %247 = vmax.xlane.f32.xlu0 %v246
        %v248 = vpop.xlane.xlu0 %247
        %v249 = vmax.f32 %v239, %v240
        %250 = vmax.xlane.f32.xlu0 %v249
        %v251 = vpop.xlane.xlu0 %250
        %v252 = vmax.f32 %v241, %v242
        %253 = vmax.xlane.f32.xlu0 %v252
        %v254 = vpop.xlane.xlu0 %253
        %v255 = vadd.f32 %v235, %v236
        %256 = vadd.xlane.f32.xlu0 %v255
        %v257 = vpop.xlane.xlu0 %256
        %v258 = vadd.f32 %v237, %v238
        %259 = vadd.xlane.f32.xlu0 %v258
        %v260 = vpop.xlane.xlu0 %259
        %v261 = vadd.f32 %v239, %v240
        %262 = vadd.xlane.f32.xlu0 %v261
        %v263 = vpop.xlane.xlu0 %262
        %v264 = vadd.f32 %v241, %v242
        %265 = vadd.xlane.f32.xlu0 %v264
        %v266 = vpop.xlane.xlu0 %265
        %v267 = vmul.f32 %v257, 0.00390625
        %v268 = vmul.f32 %v260, 0.00390625
        %v269 = vmul.f32 %v263, 0.00390625
        %v270 = vmul.f32 %v266, 0.00390625
        %v271 = vld [vmem:[%s0] sm:$0xff]
        %v272 = vld [vmem:[%s0 + $0x8] sm:$0xff]
        %v273 = vld [vmem:[%s0 + $0x10] sm:$0xff]
        %v274 = vld [vmem:[%s0 + $0x18] sm:$0xff]
        %v275 = vld [vmem:[%s1] sm:$0xff]
        %v276 = vld [vmem:[%s1 + $0x8] sm:$0xff]
        %v277 = vld [vmem:[%s1 + $0x10] sm:$0xff]
        %v278 = vld [vmem:[%s1 + $0x18] sm:$0xff]
        %v279 = vmul.f32 %v245, %v271
        %v280 = vmul.f32 %v248, %v272
        %v281 = vmul.f32 %v251, %v273
        %v282 = vmul.f32 %v254, %v274
        %vm283 = vcmask 64512
        %v284 = vsel %vm283, %v279, 0.0
        %v285 = vsel %vm283, %v280, 0.0
        %v286 = vadd.f32 %v284, %v285
        %v287 = vsel %vm283, %v281, 0.0
        %v288 = vadd.f32 %v286, %v287
        %v289 = vsel %vm283, %v282, 0.0
        %v290 = vadd.f32 %v288, %v289
        %v291 = vrot.slane %v290, 4
        %v292 = vadd.f32 %v290, %v291
        %v293 = vrot.slane %v292, 2
        %v294 = vadd.f32 %v292, %v293
        %v295 = vrot.slane %v294, 1
        %v296 = vadd.f32 %v294, %v295
        %v297 = vmax.f32 %v296, 0.0
        %v298 = vmul.f32 %v297, %v275
        %v299 = vmul.f32 %v297, %v276
        %v300 = vmul.f32 %v297, %v277
        %v301 = vmul.f32 %v297, %v278
        %v302 = vsel %vm283, %v298, 0.0
        %303 = vadd.xlane.f32.xlu0 %v302
        %v304 = vpop.xlane.xlu0 %303
        %v305 = vsel %vm283, %v299, 0.0
        %306 = vadd.xlane.f32.xlu0 %v305
        %v307 = vpop.xlane.xlu0 %306
        %v308 = vsel %vm283, %v300, 0.0
        %309 = vadd.xlane.f32.xlu0 %v308
        %v310 = vpop.xlane.xlu0 %309
        %v311 = vsel %vm283, %v301, 0.0
        %312 = vadd.xlane.f32.xlu0 %v311
        %v313 = vpop.xlane.xlu0 %312
        %v314 = vmul.f32 %v267, %v271
        %v315 = vmul.f32 %v268, %v272
        %v316 = vmul.f32 %v269, %v273
        %v317 = vmul.f32 %v270, %v274
        %v318 = vsel %vm283, %v314, 0.0
        %v319 = vsel %vm283, %v315, 0.0
        %v320 = vadd.f32 %v318, %v319
        %v321 = vsel %vm283, %v316, 0.0
        %v322 = vadd.f32 %v320, %v321
        %v323 = vsel %vm283, %v317, 0.0
        %v324 = vadd.f32 %v322, %v323
        %v325 = vrot.slane %v324, 4
        %v326 = vadd.f32 %v324, %v325
        %v327 = vrot.slane %v326, 2
        %v328 = vadd.f32 %v326, %v327
        %v329 = vrot.slane %v328, 1
        %v330 = vadd.f32 %v328, %v329
        %v331 = vmax.f32 %v330, 0.0
        %v332 = vmul.f32 %v331, %v275
        %v333 = vmul.f32 %v331, %v276
        %v334 = vmul.f32 %v331, %v277
        %v335 = vmul.f32 %v331, %v278
        %v336 = vsel %vm283, %v332, 0.0
        %337 = vadd.xlane.f32.xlu0 %v336
        %v338 = vpop.xlane.xlu0 %337
        %v339 = vsel %vm283, %v333, 0.0
        %340 = vadd.xlane.f32.xlu0 %v339
        %v341 = vpop.xlane.xlu0 %340
        %v342 = vsel %vm283, %v334, 0.0
        %343 = vadd.xlane.f32.xlu0 %v342
        %v344 = vpop.xlane.xlu0 %343
        %v345 = vsel %vm283, %v335, 0.0
        %346 = vadd.xlane.f32.xlu0 %v345
        %v347 = vpop.xlane.xlu0 %346
        %v348 = vadd.f32 %v304, %v338
        %v349 = vadd.f32 %v307, %v341
        %v350 = vadd.f32 %v310, %v344
        %v351 = vadd.f32 %v313, %v347
        %v352 = vxor.u32 %v348, 2147483648
        %v353 = vxor.u32 %v349, 2147483648
        %v354 = vxor.u32 %v350, 2147483648
        %v355 = vxor.u32 %v351, 2147483648
        %v356 = vmul.f32 %v352, 1.442695
        %v357 = vpow.pop %v356
        %v358 = vmul.f32 %v353, 1.442695
        %v359 = vpow.pop %v358
        %v360 = vmul.f32 %v354, 1.442695
        %v361 = vpow.pop %v360
        %v362 = vmul.f32 %v355, 1.442695
        %v363 = vpow.pop %v362
        %v364 = vadd.f32 %v357, 1.0
        %v365 = vadd.f32 %v359, 1.0
        %v366 = vadd.f32 %v361, 1.0
        %v367 = vadd.f32 %v363, 1.0
        %v368 = vrcp.pop %v364
        %v369 = vmul.f32 %v364, %v368
        %v370 = vsub.f32 1.0, %v369
        %v371 = vmul.f32 %v368, %v370
        %v372 = vadd.f32 %v368, %v371
        %vm373 = vweird.f32 %v364
        %vm374 = vweird.f32 %v368
        %vm375 = vmor %vm373, %vm374
        %v376 = vsel %vm375, %v368, %v372
        %v377 = vand.u32 2147483647, %v364
        %vm378 = vcmp.eq.f32.partialorder %v377, 8.507059e+37
        %v379 = vand.u32 %v364, 2147483648
        %v380 = vor.u32 1.1754944e-38, %v379
        %v381 = vsel %vm378, %v380, %v376
        %v382 = vmul.f32 1.0, %v381
        %v383 = vrcp.pop %v365
        %v384 = vmul.f32 %v365, %v383
        %v385 = vsub.f32 1.0, %v384
        %v386 = vmul.f32 %v383, %v385
        %v387 = vadd.f32 %v383, %v386
        %vm388 = vweird.f32 %v365
        %vm389 = vweird.f32 %v383
        %vm390 = vmor %vm388, %vm389
        %v391 = vsel %vm390, %v383, %v387
        %v392 = vand.u32 2147483647, %v365
        %vm393 = vcmp.eq.f32.partialorder %v392, 8.507059e+37
        %v394 = vand.u32 %v365, 2147483648
        %v395 = vor.u32 1.1754944e-38, %v394
        %v396 = vsel %vm393, %v395, %v391
        %v397 = vmul.f32 1.0, %v396
        %v398 = vrcp.pop %v366
        %v399 = vmul.f32 %v366, %v398
        %v400 = vsub.f32 1.0, %v399
        %v401 = vmul.f32 %v398, %v400
        %v402 = vadd.f32 %v398, %v401
        %vm403 = vweird.f32 %v366
        %vm404 = vweird.f32 %v398
        %vm405 = vmor %vm403, %vm404
        %v406 = vsel %vm405, %v398, %v402
        %v407 = vand.u32 2147483647, %v366
        %vm408 = vcmp.eq.f32.partialorder %v407, 8.507059e+37
        %v409 = vand.u32 %v366, 2147483648
        %v410 = vor.u32 1.1754944e-38, %v409
        %v411 = vsel %vm408, %v410, %v406
        %v412 = vmul.f32 1.0, %v411
        %v413 = vrcp.pop %v367
        %v414 = vmul.f32 %v367, %v413
        %v415 = vsub.f32 1.0, %v414
        %v416 = vmul.f32 %v413, %v415
        %v417 = vadd.f32 %v413, %v416
        %vm418 = vweird.f32 %v367
        %vm419 = vweird.f32 %v413
        %vm420 = vmor %vm418, %vm419
        %v421 = vsel %vm420, %v413, %v417
        %v422 = vand.u32 2147483647, %v367
        %vm423 = vcmp.eq.f32.partialorder %v422, 8.507059e+37
        %v424 = vand.u32 %v367, 2147483648
        %v425 = vor.u32 1.1754944e-38, %v424
        %v426 = vsel %vm423, %v425, %v421
        %v427 = vmul.f32 1.0, %v426
        %v428 = vmul.f32 %v382, %v235
        %v429 = vmul.f32 %v382, %v236
        %v430 = vmul.f32 %v397, %v237
        %v431 = vmul.f32 %v397, %v238
        %v432 = vmul.f32 %v412, %v239
        %v433 = vmul.f32 %v412, %v240
        %v434 = vmul.f32 %v427, %v241
        %v435 = vmul.f32 %v427, %v242
        %436 = vst [vmem:[#allocation2] sm:$0xff] %v428
        %437 = vst [vmem:[#allocation2 + $0x8] sm:$0xff] %v429
        %438 = vst [vmem:[#allocation2 + $0x10] sm:$0xff] %v430
        %439 = vst [vmem:[#allocation2 + $0x18] sm:$0xff] %v431
        %440 = vst [vmem:[#allocation2 + $0x20] sm:$0xff] %v432
        %441 = vst [vmem:[#allocation2 + $0x28] sm:$0xff] %v433
        %442 = vst [vmem:[#allocation2 + $0x30] sm:$0xff] %v434
        %443 = vst [vmem:[#allocation2 + $0x38] sm:$0xff] %v435
        %v444 = vld [vmem:[#allocation2] sm:$0xff]
        %v445 = vld [vmem:[#allocation2 + $0x8] sm:$0xff]
        %v446 = vld [vmem:[#allocation2 + $0x10] sm:$0xff]
        %v447 = vld [vmem:[#allocation2 + $0x18] sm:$0xff]
        %v448 = vld [vmem:[#allocation2 + $0x20] sm:$0xff]
        %v449 = vld [vmem:[#allocation2 + $0x28] sm:$0xff]
        %v450 = vld [vmem:[#allocation2 + $0x30] sm:$0xff]
        %v451 = vld [vmem:[#allocation2 + $0x38] sm:$0xff]
        %v452 = vmax.f32 %v444, %v448
        %v453 = vmax.f32 %v446, %v450
        %v454 = vmax.f32 %v452, %v453
        %v455 = vrot.slane %v454, 4
        %v456 = vmax.f32 %v454, %v455
        %v457 = vrot.slane %v456, 2
        %v458 = vmax.f32 %v456, %v457
        %v459 = vrot.slane %v458, 1
        %v460 = vmax.f32 %v458, %v459
        %v461 = vmax.f32 %v445, %v449
        %v462 = vmax.f32 %v447, %v451
        %v463 = vmax.f32 %v461, %v462
        %v464 = vrot.slane %v463, 4
        %v465 = vmax.f32 %v463, %v464
        %v466 = vrot.slane %v465, 2
        %v467 = vmax.f32 %v465, %v466
        %v468 = vrot.slane %v467, 1
        %v469 = vmax.f32 %v467, %v468
        %v470 = vadd.f32 %v444, %v446
        %v471 = vadd.f32 %v470, %v448
        %v472 = vadd.f32 %v471, %v450
        %v473 = vrot.slane %v472, 4
        %v474 = vadd.f32 %v472, %v473
        %v475 = vrot.slane %v474, 2
        %v476 = vadd.f32 %v474, %v475
        %v477 = vrot.slane %v476, 1
        %v478 = vadd.f32 %v476, %v477
        %v479 = vadd.f32 %v445, %v447
        %v480 = vadd.f32 %v479, %v449
        %v481 = vadd.f32 %v480, %v451
        %v482 = vrot.slane %v481, 4
        %v483 = vadd.f32 %v481, %v482
        %v484 = vrot.slane %v483, 2
        %v485 = vadd.f32 %v483, %v484
        %v486 = vrot.slane %v485, 1
        %v487 = vadd.f32 %v485, %v486
        %v488 = vlaneseq
        %v489 = vshrl.u32 %v488, 7
        %vm490 = vcmp.eq.s32.totalorder %v489, 0
        %v491 = vsel %vm490, %v460, %v478
        %v492 = vsel %vm490, %v469, %v487
        %493 = vrot.lane.b32.xlu0 %v491, 51
        %v494 = vpop.permute.xlu0 %493
        %495 = vrot.lane.b32.xlu0 %v492, 51
        %v496 = vpop.permute.xlu0 %495
        %v497 = vlaneseq
        %v498 = vand.u32 %v497, 127
        %vm499 = vcmp.lt.s32.totalorder %v498, 51
        %v500 = vsel %vm499, %v494, %v496
        %v501 = vsel %vm499, %v496, %v494
        %v502 = vld [vmem:[#allocation3] sm:$0xf]
        %504 = vst [vmem:[#allocation1] ss:$4 sm:$0xff] %v502
        %v505 = vld.sshfl [vmem:[#allocation1] sm:$0xff pattern:$0x73625140]
        %v506 = vld.sshfl [vmem:[#allocation1 + $0x8] sm:$0xff pattern:$0x73625140]
        %v509 = vmul.f32 %v501, %v505
        %v510 = vmul.f32 %v500, %v506
        %v511 = vadd.f32 %v509, 0.0
        %v512 = vadd.f32 %v510, 0.0
        %513 = vrot.lane.b32.xlu0 %v491, 50
        %v514 = vpop.permute.xlu0 %513
        %515 = vrot.lane.b32.xlu0 %v492, 50
        %v516 = vpop.permute.xlu0 %515
        %vm517 = vcmp.lt.s32.totalorder %v498, 50
        %v518 = vsel %vm517, %v514, %v516
        %v519 = vsel %vm517, %v516, %v514
        %s520 = scalar_lea.vmem [#allocation3], 4
        %v521 = vld [vmem:[%s520] sm:$0xf]
        %523 = vst [vmem:[#allocation1] ss:$4 sm:$0xff] %v521
        %v524 = vld.sshfl [vmem:[#allocation1] sm:$0xff pattern:$0x73625140]
        %v525 = vld.sshfl [vmem:[#allocation1 + $0x8] sm:$0xff pattern:$0x73625140]
        %v528 = vmul.f32 %v519, %v524
        %v529 = vmul.f32 %v518, %v525
        %v530 = vadd.f32 %v511, %v528
        %v531 = vadd.f32 %v512, %v529
        %532 = vrot.lane.b32.xlu0 %v491, 49
        %v533 = vpop.permute.xlu0 %532
        %534 = vrot.lane.b32.xlu0 %v492, 49
        %v535 = vpop.permute.xlu0 %534
        %vm536 = vcmp.lt.s32.totalorder %v498, 49
        %v537 = vsel %vm536, %v533, %v535
        %v538 = vsel %vm536, %v535, %v533
        %s539 = scalar_lea.vmem [#allocation3], 8
        %v540 = vld [vmem:[%s539] sm:$0xf]
        %542 = vst [vmem:[#allocation1] ss:$4 sm:$0xff] %v540
        %v543 = vld.sshfl [vmem:[#allocation1] sm:$0xff pattern:$0x73625140]
        %v544 = vld.sshfl [vmem:[#allocation1 + $0x8] sm:$0xff pattern:$0x73625140]
        %v547 = vmul.f32 %v538, %v543
        %v548 = vmul.f32 %v537, %v544
        %v549 = vadd.f32 %v530, %v547
        %v550 = vadd.f32 %v531, %v548
        %551 = vrot.lane.b32.xlu0 %v491, 48
        %v552 = vpop.permute.xlu0 %551
        %553 = vrot.lane.b32.xlu0 %v492, 48
        %v554 = vpop.permute.xlu0 %553
        %vm555 = vcmp.lt.s32.totalorder %v498, 48
        %v556 = vsel %vm555, %v552, %v554
        %v557 = vsel %vm555, %v554, %v552
        %s558 = scalar_lea.vmem [#allocation3], 12
        %v559 = vld [vmem:[%s558] sm:$0xf]
        %561 = vst [vmem:[#allocation1] ss:$4 sm:$0xff] %v559
        %v562 = vld.sshfl [vmem:[#allocation1] sm:$0xff pattern:$0x73625140]
        %v563 = vld.sshfl [vmem:[#allocation1 + $0x8] sm:$0xff pattern:$0x73625140]
        %v566 = vmul.f32 %v557, %v562
        %v567 = vmul.f32 %v556, %v563
        %v568 = vadd.f32 %v549, %v566
        %v569 = vadd.f32 %v550, %v567
        %570 = vrot.lane.b32.xlu0 %v491, 47
        %v571 = vpop.permute.xlu0 %570
        %572 = vrot.lane.b32.xlu0 %v492, 47
        %v573 = vpop.permute.xlu0 %572
        %vm574 = vcmp.lt.s32.totalorder %v498, 47
        %v575 = vsel %vm574, %v571, %v573
        %v576 = vsel %vm574, %v573, %v571
        %s577 = scalar_lea.vmem [#allocation3], 16
        %v578 = vld [vmem:[%s577] sm:$0xf]
        %580 = vst [vmem:[#allocation1] ss:$4 sm:$0xff] %v578
        %v581 = vld.sshfl [vmem:[#allocation1] sm:$0xff pattern:$0x73625140]
        %v582 = vld.sshfl [vmem:[#allocation1 + $0x8] sm:$0xff pattern:$0x73625140]
        %v585 = vmul.f32 %v576, %v581
        %v586 = vmul.f32 %v575, %v582
        %v587 = vadd.f32 %v568, %v585
        %v588 = vadd.f32 %v569, %v586
        %589 = vrot.lane.b32.xlu0 %v491, 46
        %v590 = vpop.permute.xlu0 %589
        %591 = vrot.lane.b32.xlu0 %v492, 46
        %v592 = vpop.permute.xlu0 %591
        %vm593 = vcmp.lt.s32.totalorder %v498, 46
        %v594 = vsel %vm593, %v590, %v592
        %v595 = vsel %vm593, %v592, %v590
        %s596 = scalar_lea.vmem [#allocation3], 20
        %v597 = vld [vmem:[%s596] sm:$0xf]
        %599 = vst [vmem:[#allocation1] ss:$4 sm:$0xff] %v597
        %v600 = vld.sshfl [vmem:[#allocation1] sm:$0xff pattern:$0x73625140]
        %v601 = vld.sshfl [vmem:[#allocation1 + $0x8] sm:$0xff pattern:$0x73625140]
        %v604 = vmul.f32 %v595, %v600
        %v605 = vmul.f32 %v594, %v601
        %v606 = vadd.f32 %v587, %v604
        %v607 = vadd.f32 %v588, %v605
        %608 = vrot.lane.b32.xlu0 %v491, 45
        %v609 = vpop.permute.xlu0 %608
        %610 = vrot.lane.b32.xlu0 %v492, 45
        %v611 = vpop.permute.xlu0 %610
        %vm612 = vcmp.lt.s32.totalorder %v498, 45
        %v613 = vsel %vm612, %v609, %v611
        %v614 = vsel %vm612, %v611, %v609
        %s615 = scalar_lea.vmem [#allocation3], 24
        %v616 = vld [vmem:[%s615] sm:$0xf]
        %618 = vst [vmem:[#allocation1] ss:$4 sm:$0xff] %v616
        %v619 = vld.sshfl [vmem:[#allocation1] sm:$0xff pattern:$0x73625140]
        %v620 = vld.sshfl [vmem:[#allocation1 + $0x8] sm:$0xff pattern:$0x73625140]
        %v623 = vmul.f32 %v614, %v619
        %v624 = vmul.f32 %v613, %v620
        %v625 = vadd.f32 %v606, %v623
        %v626 = vadd.f32 %v607, %v624
        %627 = vrot.lane.b32.xlu0 %v491, 35
        %v628 = vpop.permute.xlu0 %627
        %629 = vrot.lane.b32.xlu0 %v492, 35
        %v630 = vpop.permute.xlu0 %629
        %vm631 = vcmp.lt.s32.totalorder %v498, 35
        %v632 = vsel %vm631, %v628, %v630
        %v633 = vsel %vm631, %v630, %v628
        %s634 = scalar_lea.vmem [#allocation3], 28
        %v635 = vld [vmem:[%s634] sm:$0xf]
        %637 = vst [vmem:[#allocation1] ss:$4 sm:$0xff] %v635
        %v638 = vld.sshfl [vmem:[#allocation1] sm:$0xff pattern:$0x73625140]
        %v639 = vld.sshfl [vmem:[#allocation1 + $0x8] sm:$0xff pattern:$0x73625140]
        %v642 = vmul.f32 %v633, %v638
        %v643 = vmul.f32 %v632, %v639
        %v644 = vadd.f32 %v625, %v642
        %v645 = vadd.f32 %v626, %v643
        %646 = vrot.lane.b32.xlu0 %v491, 34
        %v647 = vpop.permute.xlu0 %646
        %648 = vrot.lane.b32.xlu0 %v492, 34
        %v649 = vpop.permute.xlu0 %648
        %vm650 = vcmp.lt.s32.totalorder %v498, 34
        %v651 = vsel %vm650, %v647, %v649
        %v652 = vsel %vm650, %v649, %v647
        %s653 = scalar_lea.vmem [#allocation3], 32
        %v654 = vld [vmem:[%s653] sm:$0xf]
        %656 = vst [vmem:[#allocation1] ss:$4 sm:$0xff] %v654
        %v657 = vld.sshfl [vmem:[#allocation1] sm:$0xff pattern:$0x73625140]
        %v658 = vld.sshfl [vmem:[#allocation1 + $0x8] sm:$0xff pattern:$0x73625140]
        %v661 = vmul.f32 %v652, %v657
        %v662 = vmul.f32 %v651, %v658
        %v663 = vadd.f32 %v644, %v661
        %v664 = vadd.f32 %v645, %v662
        %665 = vrot.lane.b32.xlu0 %v491, 33
        %v666 = vpop.permute.xlu0 %665
        %667 = vrot.lane.b32.xlu0 %v492, 33
        %v668 = vpop.permute.xlu0 %667
        %vm669 = vcmp.lt.s32.totalorder %v498, 33
        %v670 = vsel %vm669, %v666, %v668
        %v671 = vsel %vm669, %v668, %v666
        %s672 = scalar_lea.vmem [#allocation3], 36
        %v673 = vld [vmem:[%s672] sm:$0xf]
        %675 = vst [vmem:[#allocation1] ss:$4 sm:$0xff] %v673
        %v676 = vld.sshfl [vmem:[#allocation1] sm:$0xff pattern:$0x73625140]
        %v677 = vld.sshfl [vmem:[#allocation1 + $0x8] sm:$0xff pattern:$0x73625140]
        %v680 = vmul.f32 %v671, %v676
        %v681 = vmul.f32 %v670, %v677
        %v682 = vadd.f32 %v663, %v680
        %v683 = vadd.f32 %v664, %v681
        %684 = vrot.lane.b32.xlu0 %v491, 32
        %v685 = vpop.permute.xlu0 %684
        %686 = vrot.lane.b32.xlu0 %v492, 32
        %v687 = vpop.permute.xlu0 %686
        %vm688 = vcmp.lt.s32.totalorder %v498, 32
        %v689 = vsel %vm688, %v685, %v687
        %v690 = vsel %vm688, %v687, %v685
        %s691 = scalar_lea.vmem [#allocation3], 40
        %v692 = vld [vmem:[%s691] sm:$0xf]
        %694 = vst [vmem:[#allocation1] ss:$4 sm:$0xff] %v692
        %v695 = vld.sshfl [vmem:[#allocation1] sm:$0xff pattern:$0x73625140]
        %v696 = vld.sshfl [vmem:[#allocation1 + $0x8] sm:$0xff pattern:$0x73625140]
        %v699 = vmul.f32 %v690, %v695
        %v700 = vmul.f32 %v689, %v696
        %v701 = vadd.f32 %v682, %v699
        %v702 = vadd.f32 %v683, %v700
        %703 = vrot.lane.b32.xlu0 %v491, 31
        %v704 = vpop.permute.xlu0 %703
        %705 = vrot.lane.b32.xlu0 %v492, 31
        %v706 = vpop.permute.xlu0 %705
        %vm707 = vcmp.lt.s32.totalorder %v498, 31
        %v708 = vsel %vm707, %v704, %v706
        %v709 = vsel %vm707, %v706, %v704
        %s710 = scalar_lea.vmem [#allocation3], 44
        %v711 = vld [vmem:[%s710] sm:$0xf]
        %713 = vst [vmem:[#allocation1] ss:$4 sm:$0xff] %v711
        %v714 = vld.sshfl [vmem:[#allocation1] sm:$0xff pattern:$0x73625140]
        %v715 = vld.sshfl [vmem:[#allocation1 + $0x8] sm:$0xff pattern:$0x73625140]
        %v718 = vmul.f32 %v709, %v714
        %v719 = vmul.f32 %v708, %v715
        %v720 = vadd.f32 %v701, %v718
        %v721 = vadd.f32 %v702, %v719
        %722 = vrot.lane.b32.xlu0 %v491, 30
        %v723 = vpop.permute.xlu0 %722
        %724 = vrot.lane.b32.xlu0 %v492, 30
        %v725 = vpop.permute.xlu0 %724
        %vm726 = vcmp.lt.s32.totalorder %v498, 30
        %v727 = vsel %vm726, %v723, %v725
        %v728 = vsel %vm726, %v725, %v723
        %s729 = scalar_lea.vmem [#allocation3], 48
        %v730 = vld [vmem:[%s729] sm:$0xf]
        %732 = vst [vmem:[#allocation1] ss:$4 sm:$0xff] %v730
        %v733 = vld.sshfl [vmem:[#allocation1] sm:$0xff pattern:$0x73625140]
        %v734 = vld.sshfl [vmem:[#allocation1 + $0x8] sm:$0xff pattern:$0x73625140]
        %v737 = vmul.f32 %v728, %v733
        %v738 = vmul.f32 %v727, %v734
        %v739 = vadd.f32 %v720, %v737
        %v740 = vadd.f32 %v721, %v738
        %741 = vrot.lane.b32.xlu0 %v491, 29
        %v742 = vpop.permute.xlu0 %741
        %743 = vrot.lane.b32.xlu0 %v492, 29
        %v744 = vpop.permute.xlu0 %743
        %vm745 = vcmp.lt.s32.totalorder %v498, 29
        %v746 = vsel %vm745, %v742, %v744
        %v747 = vsel %vm745, %v744, %v742
        %s748 = scalar_lea.vmem [#allocation3], 52
        %v749 = vld [vmem:[%s748] sm:$0xf]
        %751 = vst [vmem:[#allocation1] ss:$4 sm:$0xff] %v749
        %v752 = vld.sshfl [vmem:[#allocation1] sm:$0xff pattern:$0x73625140]
        %v753 = vld.sshfl [vmem:[#allocation1 + $0x8] sm:$0xff pattern:$0x73625140]
        %v756 = vmul.f32 %v747, %v752
        %v757 = vmul.f32 %v746, %v753
        %v758 = vadd.f32 %v739, %v756
        %v759 = vadd.f32 %v740, %v757
        %760 = vrot.lane.b32.xlu0 %v491, 19
        %v761 = vpop.permute.xlu0 %760
        %762 = vrot.lane.b32.xlu0 %v492, 19
        %v763 = vpop.permute.xlu0 %762
        %vm764 = vcmp.lt.s32.totalorder %v498, 19
        %v765 = vsel %vm764, %v761, %v763
        %v766 = vsel %vm764, %v763, %v761
        %s767 = scalar_lea.vmem [#allocation3], 56
        %v768 = vld [vmem:[%s767] sm:$0xf]
        %770 = vst [vmem:[#allocation1] ss:$4 sm:$0xff] %v768
        %v771 = vld.sshfl [vmem:[#allocation1] sm:$0xff pattern:$0x73625140]
        %v772 = vld.sshfl [vmem:[#allocation1 + $0x8] sm:$0xff pattern:$0x73625140]
        %v775 = vmul.f32 %v766, %v771
        %v776 = vmul.f32 %v765, %v772
        %v777 = vadd.f32 %v758, %v775
        %v778 = vadd.f32 %v759, %v776
        %779 = vrot.lane.b32.xlu0 %v491, 18
        %v780 = vpop.permute.xlu0 %779
        %781 = vrot.lane.b32.xlu0 %v492, 18
        %v782 = vpop.permute.xlu0 %781
        %vm783 = vcmp.lt.s32.totalorder %v498, 18
        %v784 = vsel %vm783, %v780, %v782
        %v785 = vsel %vm783, %v782, %v780
        %s786 = scalar_lea.vmem [#allocation3], 60
        %v787 = vld [vmem:[%s786] sm:$0xf]
        %789 = vst [vmem:[#allocation1] ss:$4 sm:$0xff] %v787
        %v790 = vld.sshfl [vmem:[#allocation1] sm:$0xff pattern:$0x73625140]
        %v791 = vld.sshfl [vmem:[#allocation1 + $0x8] sm:$0xff pattern:$0x73625140]
        %v794 = vmul.f32 %v785, %v790
        %v795 = vmul.f32 %v784, %v791
        %v796 = vadd.f32 %v777, %v794
        %v797 = vadd.f32 %v778, %v795
        %798 = vrot.lane.b32.xlu0 %v491, 17
        %v799 = vpop.permute.xlu0 %798
        %800 = vrot.lane.b32.xlu0 %v492, 17
        %v801 = vpop.permute.xlu0 %800
        %vm802 = vcmp.lt.s32.totalorder %v498, 17
        %v803 = vsel %vm802, %v799, %v801
        %v804 = vsel %vm802, %v801, %v799
        %s805 = scalar_lea.vmem [#allocation3], 64
        %v806 = vld [vmem:[%s805] sm:$0xf]
        %808 = vst [vmem:[#allocation1] ss:$4 sm:$0xff] %v806
        %v809 = vld.sshfl [vmem:[#allocation1] sm:$0xff pattern:$0x73625140]
        %v810 = vld.sshfl [vmem:[#allocation1 + $0x8] sm:$0xff pattern:$0x73625140]
        %v813 = vmul.f32 %v804, %v809
        %v814 = vmul.f32 %v803, %v810
        %v815 = vadd.f32 %v796, %v813
        %v816 = vadd.f32 %v797, %v814
        %817 = vrot.lane.b32.xlu0 %v491, 16
        %v818 = vpop.permute.xlu0 %817
        %819 = vrot.lane.b32.xlu0 %v492, 16
        %v820 = vpop.permute.xlu0 %819
        %vm821 = vcmp.lt.s32.totalorder %v498, 16
        %v822 = vsel %vm821, %v818, %v820
        %v823 = vsel %vm821, %v820, %v818
        %s824 = scalar_lea.vmem [#allocation3], 68
        %v825 = vld [vmem:[%s824] sm:$0xf]
        %827 = vst [vmem:[#allocation1] ss:$4 sm:$0xff] %v825
        %v828 = vld.sshfl [vmem:[#allocation1] sm:$0xff pattern:$0x73625140]
        %v829 = vld.sshfl [vmem:[#allocation1 + $0x8] sm:$0xff pattern:$0x73625140]
        %v832 = vmul.f32 %v823, %v828
        %v833 = vmul.f32 %v822, %v829
        %v834 = vadd.f32 %v815, %v832
        %v835 = vadd.f32 %v816, %v833
        %836 = vrot.lane.b32.xlu0 %v491, 15
        %v837 = vpop.permute.xlu0 %836
        %838 = vrot.lane.b32.xlu0 %v492, 15
        %v839 = vpop.permute.xlu0 %838
        %vm840 = vcmp.lt.s32.totalorder %v498, 15
        %v841 = vsel %vm840, %v837, %v839
        %v842 = vsel %vm840, %v839, %v837
        %s843 = scalar_lea.vmem [#allocation3], 72
        %v844 = vld [vmem:[%s843] sm:$0xf]
        %846 = vst [vmem:[#allocation1] ss:$4 sm:$0xff] %v844
        %v847 = vld.sshfl [vmem:[#allocation1] sm:$0xff pattern:$0x73625140]
        %v848 = vld.sshfl [vmem:[#allocation1 + $0x8] sm:$0xff pattern:$0x73625140]
        %v851 = vmul.f32 %v842, %v847
        %v852 = vmul.f32 %v841, %v848
        %v853 = vadd.f32 %v834, %v851
        %v854 = vadd.f32 %v835, %v852
        %855 = vrot.lane.b32.xlu0 %v491, 14
        %v856 = vpop.permute.xlu0 %855
        %857 = vrot.lane.b32.xlu0 %v492, 14
        %v858 = vpop.permute.xlu0 %857
        %vm859 = vcmp.lt.s32.totalorder %v498, 14
        %v860 = vsel %vm859, %v856, %v858
        %v861 = vsel %vm859, %v858, %v856
        %s862 = scalar_lea.vmem [#allocation3], 76
        %v863 = vld [vmem:[%s862] sm:$0xf]
        %865 = vst [vmem:[#allocation1] ss:$4 sm:$0xff] %v863
        %v866 = vld.sshfl [vmem:[#allocation1] sm:$0xff pattern:$0x73625140]
        %v867 = vld.sshfl [vmem:[#allocation1 + $0x8] sm:$0xff pattern:$0x73625140]
        %v870 = vmul.f32 %v861, %v866
        %v871 = vmul.f32 %v860, %v867
        %v872 = vadd.f32 %v853, %v870
        %v873 = vadd.f32 %v854, %v871
        %874 = vrot.lane.b32.xlu0 %v491, 13
        %v875 = vpop.permute.xlu0 %874
        %876 = vrot.lane.b32.xlu0 %v492, 13
        %v877 = vpop.permute.xlu0 %876
        %vm878 = vcmp.lt.s32.totalorder %v498, 13
        %v879 = vsel %vm878, %v875, %v877
        %v880 = vsel %vm878, %v877, %v875
        %s881 = scalar_lea.vmem [#allocation3], 80
        %v882 = vld [vmem:[%s881] sm:$0xf]
        %884 = vst [vmem:[#allocation1] ss:$4 sm:$0xff] %v882
        %v885 = vld.sshfl [vmem:[#allocation1] sm:$0xff pattern:$0x73625140]
        %v886 = vld.sshfl [vmem:[#allocation1 + $0x8] sm:$0xff pattern:$0x73625140]
        %v889 = vmul.f32 %v880, %v885
        %v890 = vmul.f32 %v879, %v886
        %v891 = vadd.f32 %v872, %v889
        %v892 = vadd.f32 %v873, %v890
        %893 = vrot.lane.b32.xlu0 %v491, 3
        %v894 = vpop.permute.xlu0 %893
        %895 = vrot.lane.b32.xlu0 %v492, 3
        %v896 = vpop.permute.xlu0 %895
        %vm897 = vcmp.lt.s32.totalorder %v498, 3
        %v898 = vsel %vm897, %v894, %v896
        %v899 = vsel %vm897, %v896, %v894
        %s900 = scalar_lea.vmem [#allocation3], 84
        %v901 = vld [vmem:[%s900] sm:$0xf]
        %903 = vst [vmem:[#allocation1] ss:$4 sm:$0xff] %v901
        %v904 = vld.sshfl [vmem:[#allocation1] sm:$0xff pattern:$0x73625140]
        %v905 = vld.sshfl [vmem:[#allocation1 + $0x8] sm:$0xff pattern:$0x73625140]
        %v908 = vmul.f32 %v899, %v904
        %v909 = vmul.f32 %v898, %v905
        %v910 = vadd.f32 %v891, %v908
        %v911 = vadd.f32 %v892, %v909
        %912 = vrot.lane.b32.xlu0 %v491, 2
        %v913 = vpop.permute.xlu0 %912
        %914 = vrot.lane.b32.xlu0 %v492, 2
        %v915 = vpop.permute.xlu0 %914
        %vm916 = vcmp.lt.s32.totalorder %v498, 2
        %v917 = vsel %vm916, %v913, %v915
        %v918 = vsel %vm916, %v915, %v913
        %s919 = scalar_lea.vmem [#allocation3], 88
        %v920 = vld [vmem:[%s919] sm:$0xf]
        %922 = vst [vmem:[#allocation1] ss:$4 sm:$0xff] %v920
        %v923 = vld.sshfl [vmem:[#allocation1] sm:$0xff pattern:$0x73625140]
        %v924 = vld.sshfl [vmem:[#allocation1 + $0x8] sm:$0xff pattern:$0x73625140]
        %v927 = vmul.f32 %v918, %v923
        %v928 = vmul.f32 %v917, %v924
        %v929 = vadd.f32 %v910, %v927
        %v930 = vadd.f32 %v911, %v928
        %931 = vrot.lane.b32.xlu0 %v491, 1
        %v932 = vpop.permute.xlu0 %931
        %933 = vrot.lane.b32.xlu0 %v492, 1
        %v934 = vpop.permute.xlu0 %933
        %vm935 = vcmp.lt.s32.totalorder %v498, 1
        %v936 = vsel %vm935, %v932, %v934
        %v937 = vsel %vm935, %v934, %v932
        %s938 = scalar_lea.vmem [#allocation3], 92
        %v939 = vld [vmem:[%s938] sm:$0xf]
        %941 = vst [vmem:[#allocation1] ss:$4 sm:$0xff] %v939
        %v942 = vld.sshfl [vmem:[#allocation1] sm:$0xff pattern:$0x73625140]
        %v943 = vld.sshfl [vmem:[#allocation1 + $0x8] sm:$0xff pattern:$0x73625140]
        %v946 = vmul.f32 %v937, %v942
        %v947 = vmul.f32 %v936, %v943
        %v948 = vadd.f32 %v929, %v946
        %v949 = vadd.f32 %v930, %v947
        %s950 = scalar_lea.vmem [#allocation3], 96
        %v951 = vld [vmem:[%s950] sm:$0xf]
        %953 = vst [vmem:[#allocation1] ss:$4 sm:$0xff] %v951
        %v954 = vld.sshfl [vmem:[#allocation1] sm:$0xff pattern:$0x73625140]
        %v955 = vld.sshfl [vmem:[#allocation1 + $0x8] sm:$0xff pattern:$0x73625140]
        %v958 = vmul.f32 %v491, %v954
        %v959 = vmul.f32 %v492, %v955
        %v960 = vadd.f32 %v948, %v958
        %v961 = vadd.f32 %v949, %v959
        %962 = vrot.lane.b32.xlu0 %v491, 127
        %v963 = vpop.permute.xlu0 %962
        %964 = vrot.lane.b32.xlu0 %v492, 127
        %v965 = vpop.permute.xlu0 %964
        %vm966 = vcmp.lt.s32.totalorder %v498, 127
        %v967 = vsel %vm966, %v963, %v965
        %v968 = vsel %vm966, %v965, %v963
        %s969 = scalar_lea.vmem [#allocation3], 100
        %v970 = vld [vmem:[%s969] sm:$0xf]
        %972 = vst [vmem:[#allocation1] ss:$4 sm:$0xff] %v970
        %v973 = vld.sshfl [vmem:[#allocation1] sm:$0xff pattern:$0x73625140]
        %v974 = vld.sshfl [vmem:[#allocation1 + $0x8] sm:$0xff pattern:$0x73625140]
        %v977 = vmul.f32 %v967, %v973
        %v978 = vmul.f32 %v968, %v974
        %v979 = vadd.f32 %v960, %v977
        %v980 = vadd.f32 %v961, %v978
        %981 = vrot.lane.b32.xlu0 %v491, 126
        %v982 = vpop.permute.xlu0 %981
        %983 = vrot.lane.b32.xlu0 %v492, 126
        %v984 = vpop.permute.xlu0 %983
        %vm985 = vcmp.lt.s32.totalorder %v498, 126
        %v986 = vsel %vm985, %v982, %v984
        %v987 = vsel %vm985, %v984, %v982
        %s988 = scalar_lea.vmem [#allocation3], 104
        %v989 = vld [vmem:[%s988] sm:$0xf]
        %991 = vst [vmem:[#allocation1] ss:$4 sm:$0xff] %v989
        %v992 = vld.sshfl [vmem:[#allocation1] sm:$0xff pattern:$0x73625140]
        %v993 = vld.sshfl [vmem:[#allocation1 + $0x8] sm:$0xff pattern:$0x73625140]
        %v996 = vmul.f32 %v986, %v992
        %v997 = vmul.f32 %v987, %v993
        %v998 = vadd.f32 %v979, %v996
        %v999 = vadd.f32 %v980, %v997
        %1000 = vrot.lane.b32.xlu0 %v491, 125
        %v1001 = vpop.permute.xlu0 %1000
        %1002 = vrot.lane.b32.xlu0 %v492, 125
        %v1003 = vpop.permute.xlu0 %1002
        %vm1004 = vcmp.lt.s32.totalorder %v498, 125
        %v1005 = vsel %vm1004, %v1001, %v1003
        %v1006 = vsel %vm1004, %v1003, %v1001
        %s1007 = scalar_lea.vmem [#allocation3], 108
        %v1008 = vld [vmem:[%s1007] sm:$0xf]
        %1010 = vst [vmem:[#allocation1] ss:$4 sm:$0xff] %v1008
        %v1011 = vld.sshfl [vmem:[#allocation1] sm:$0xff pattern:$0x73625140]
        %v1012 = vld.sshfl [vmem:[#allocation1 + $0x8] sm:$0xff pattern:$0x73625140]
        %v1015 = vmul.f32 %v1005, %v1011
        %v1016 = vmul.f32 %v1006, %v1012
        %v1017 = vadd.f32 %v998, %v1015
        %v1018 = vadd.f32 %v999, %v1016
        %1019 = vrot.lane.b32.xlu0 %v491, 115
        %v1020 = vpop.permute.xlu0 %1019
        %1021 = vrot.lane.b32.xlu0 %v492, 115
        %v1022 = vpop.permute.xlu0 %1021
        %vm1023 = vcmp.lt.s32.totalorder %v498, 115
        %v1024 = vsel %vm1023, %v1020, %v1022
        %v1025 = vsel %vm1023, %v1022, %v1020
        %s1026 = scalar_lea.vmem [#allocation3], 112
        %v1027 = vld [vmem:[%s1026] sm:$0xf]
        %1029 = vst [vmem:[#allocation1] ss:$4 sm:$0xff] %v1027
        %v1030 = vld.sshfl [vmem:[#allocation1] sm:$0xff pattern:$0x73625140]
        %v1031 = vld.sshfl [vmem:[#allocation1 + $0x8] sm:$0xff pattern:$0x73625140]
        %v1034 = vmul.f32 %v1024, %v1030
        %v1035 = vmul.f32 %v1025, %v1031
        %v1036 = vadd.f32 %v1017, %v1034
        %v1037 = vadd.f32 %v1018, %v1035
        %1038 = vrot.lane.b32.xlu0 %v491, 114
        %v1039 = vpop.permute.xlu0 %1038
        %1040 = vrot.lane.b32.xlu0 %v492, 114
        %v1041 = vpop.permute.xlu0 %1040
        %vm1042 = vcmp.lt.s32.totalorder %v498, 114
        %v1043 = vsel %vm1042, %v1039, %v1041
        %v1044 = vsel %vm1042, %v1041, %v1039
        %s1045 = scalar_lea.vmem [#allocation3], 116
        %v1046 = vld [vmem:[%s1045] sm:$0xf]
        %1048 = vst [vmem:[#allocation1] ss:$4 sm:$0xff] %v1046
        %v1049 = vld.sshfl [vmem:[#allocation1] sm:$0xff pattern:$0x73625140]
        %v1050 = vld.sshfl [vmem:[#allocation1 + $0x8] sm:$0xff pattern:$0x73625140]
        %v1053 = vmul.f32 %v1043, %v1049
        %v1054 = vmul.f32 %v1044, %v1050
        %v1055 = vadd.f32 %v1036, %v1053
        %v1056 = vadd.f32 %v1037, %v1054
        %1057 = vrot.lane.b32.xlu0 %v491, 113
        %v1058 = vpop.permute.xlu0 %1057
        %1059 = vrot.lane.b32.xlu0 %v492, 113
        %v1060 = vpop.permute.xlu0 %1059
        %vm1061 = vcmp.lt.s32.totalorder %v498, 113
        %v1062 = vsel %vm1061, %v1058, %v1060
        %v1063 = vsel %vm1061, %v1060, %v1058
        %s1064 = scalar_lea.vmem [#allocation3], 120
        %v1065 = vld [vmem:[%s1064] sm:$0xf]
        %1067 = vst [vmem:[#allocation1] ss:$4 sm:$0xff] %v1065
        %v1068 = vld.sshfl [vmem:[#allocation1] sm:$0xff pattern:$0x73625140]
        %v1069 = vld.sshfl [vmem:[#allocation1 + $0x8] sm:$0xff pattern:$0x73625140]
        %v1072 = vmul.f32 %v1062, %v1068
        %v1073 = vmul.f32 %v1063, %v1069
        %v1074 = vadd.f32 %v1055, %v1072
        %v1075 = vadd.f32 %v1056, %v1073
        %1076 = vrot.lane.b32.xlu0 %v491, 112
        %v1077 = vpop.permute.xlu0 %1076
        %1078 = vrot.lane.b32.xlu0 %v492, 112
        %v1079 = vpop.permute.xlu0 %1078
        %vm1080 = vcmp.lt.s32.totalorder %v498, 112
        %v1081 = vsel %vm1080, %v1077, %v1079
        %v1082 = vsel %vm1080, %v1079, %v1077
        %s1083 = scalar_lea.vmem [#allocation3], 124
        %v1084 = vld [vmem:[%s1083] sm:$0xf]
        %1086 = vst [vmem:[#allocation1] ss:$4 sm:$0xff] %v1084
        %v1087 = vld.sshfl [vmem:[#allocation1] sm:$0xff pattern:$0x73625140]
        %v1088 = vld.sshfl [vmem:[#allocation1 + $0x8] sm:$0xff pattern:$0x73625140]
        %v1091 = vmul.f32 %v1081, %v1087
        %v1092 = vmul.f32 %v1082, %v1088
        %v1093 = vadd.f32 %v1074, %v1091
        %v1094 = vadd.f32 %v1075, %v1092
        %1095 = vrot.lane.b32.xlu0 %v491, 111
        %v1096 = vpop.permute.xlu0 %1095
        %1097 = vrot.lane.b32.xlu0 %v492, 111
        %v1098 = vpop.permute.xlu0 %1097
        %vm1099 = vcmp.lt.s32.totalorder %v498, 111
        %v1100 = vsel %vm1099, %v1096, %v1098
        %v1101 = vsel %vm1099, %v1098, %v1096
        %s1102 = scalar_lea.vmem [#allocation3], 128
        %v1103 = vld [vmem:[%s1102] sm:$0xf]
        %1105 = vst [vmem:[#allocation1] ss:$4 sm:$0xff] %v1103
        %v1106 = vld.sshfl [vmem:[#allocation1] sm:$0xff pattern:$0x73625140]
        %v1107 = vld.sshfl [vmem:[#allocation1 + $0x8] sm:$0xff pattern:$0x73625140]
        %v1110 = vmul.f32 %v1100, %v1106
        %v1111 = vmul.f32 %v1101, %v1107
        %v1112 = vadd.f32 %v1093, %v1110
        %v1113 = vadd.f32 %v1094, %v1111
        %1114 = vrot.lane.b32.xlu0 %v491, 110
        %v1115 = vpop.permute.xlu0 %1114
        %1116 = vrot.lane.b32.xlu0 %v492, 110
        %v1117 = vpop.permute.xlu0 %1116
        %vm1118 = vcmp.lt.s32.totalorder %v498, 110
        %v1119 = vsel %vm1118, %v1115, %v1117
        %v1120 = vsel %vm1118, %v1117, %v1115
        %s1121 = scalar_lea.vmem [#allocation3], 132
        %v1122 = vld [vmem:[%s1121] sm:$0xf]
        %1124 = vst [vmem:[#allocation1] ss:$4 sm:$0xff] %v1122
        %v1125 = vld.sshfl [vmem:[#allocation1] sm:$0xff pattern:$0x73625140]
        %v1126 = vld.sshfl [vmem:[#allocation1 + $0x8] sm:$0xff pattern:$0x73625140]
        %v1129 = vmul.f32 %v1119, %v1125
        %v1130 = vmul.f32 %v1120, %v1126
        %v1131 = vadd.f32 %v1112, %v1129
        %v1132 = vadd.f32 %v1113, %v1130
        %1133 = vrot.lane.b32.xlu0 %v491, 109
        %v1134 = vpop.permute.xlu0 %1133
        %1135 = vrot.lane.b32.xlu0 %v492, 109
        %v1136 = vpop.permute.xlu0 %1135
        %vm1137 = vcmp.lt.s32.totalorder %v498, 109
        %v1138 = vsel %vm1137, %v1134, %v1136
        %v1139 = vsel %vm1137, %v1136, %v1134
        %s1140 = scalar_lea.vmem [#allocation3], 136
        %v1141 = vld [vmem:[%s1140] sm:$0xf]
        %1143 = vst [vmem:[#allocation1] ss:$4 sm:$0xff] %v1141
        %v1144 = vld.sshfl [vmem:[#allocation1] sm:$0xff pattern:$0x73625140]
        %v1145 = vld.sshfl [vmem:[#allocation1 + $0x8] sm:$0xff pattern:$0x73625140]
        %v1148 = vmul.f32 %v1138, %v1144
        %v1149 = vmul.f32 %v1139, %v1145
        %v1150 = vadd.f32 %v1131, %v1148
        %v1151 = vadd.f32 %v1132, %v1149
        %1152 = vrot.lane.b32.xlu0 %v491, 99
        %v1153 = vpop.permute.xlu0 %1152
        %1154 = vrot.lane.b32.xlu0 %v492, 99
        %v1155 = vpop.permute.xlu0 %1154
        %vm1156 = vcmp.lt.s32.totalorder %v498, 99
        %v1157 = vsel %vm1156, %v1153, %v1155
        %v1158 = vsel %vm1156, %v1155, %v1153
        %s1159 = scalar_lea.vmem [#allocation3], 140
        %v1160 = vld [vmem:[%s1159] sm:$0xf]
        %1162 = vst [vmem:[#allocation1] ss:$4 sm:$0xff] %v1160
        %v1163 = vld.sshfl [vmem:[#allocation1] sm:$0xff pattern:$0x73625140]
        %v1164 = vld.sshfl [vmem:[#allocation1 + $0x8] sm:$0xff pattern:$0x73625140]
        %v1167 = vmul.f32 %v1157, %v1163
        %v1168 = vmul.f32 %v1158, %v1164
        %v1169 = vadd.f32 %v1150, %v1167
        %v1170 = vadd.f32 %v1151, %v1168
        %1171 = vrot.lane.b32.xlu0 %v491, 98
        %v1172 = vpop.permute.xlu0 %1171
        %1173 = vrot.lane.b32.xlu0 %v492, 98
        %v1174 = vpop.permute.xlu0 %1173
        %vm1175 = vcmp.lt.s32.totalorder %v498, 98
        %v1176 = vsel %vm1175, %v1172, %v1174
        %v1177 = vsel %vm1175, %v1174, %v1172
        %s1178 = scalar_lea.vmem [#allocation3], 144
        %v1179 = vld [vmem:[%s1178] sm:$0xf]
        %1181 = vst [vmem:[#allocation1] ss:$4 sm:$0xff] %v1179
        %v1182 = vld.sshfl [vmem:[#allocation1] sm:$0xff pattern:$0x73625140]
        %v1183 = vld.sshfl [vmem:[#allocation1 + $0x8] sm:$0xff pattern:$0x73625140]
        %v1186 = vmul.f32 %v1176, %v1182
        %v1187 = vmul.f32 %v1177, %v1183
        %v1188 = vadd.f32 %v1169, %v1186
        %v1189 = vadd.f32 %v1170, %v1187
        %1190 = vrot.lane.b32.xlu0 %v491, 97
        %v1191 = vpop.permute.xlu0 %1190
        %1192 = vrot.lane.b32.xlu0 %v492, 97
        %v1193 = vpop.permute.xlu0 %1192
        %vm1194 = vcmp.lt.s32.totalorder %v498, 97
        %v1195 = vsel %vm1194, %v1191, %v1193
        %v1196 = vsel %vm1194, %v1193, %v1191
        %s1197 = scalar_lea.vmem [#allocation3], 148
        %v1198 = vld [vmem:[%s1197] sm:$0xf]
        %1200 = vst [vmem:[#allocation1] ss:$4 sm:$0xff] %v1198
        %v1201 = vld.sshfl [vmem:[#allocation1] sm:$0xff pattern:$0x73625140]
        %v1202 = vld.sshfl [vmem:[#allocation1 + $0x8] sm:$0xff pattern:$0x73625140]
        %v1205 = vmul.f32 %v1195, %v1201
        %v1206 = vmul.f32 %v1196, %v1202
        %v1207 = vadd.f32 %v1188, %v1205
        %v1208 = vadd.f32 %v1189, %v1206
        %1209 = vrot.lane.b32.xlu0 %v491, 96
        %v1210 = vpop.permute.xlu0 %1209
        %1211 = vrot.lane.b32.xlu0 %v492, 96
        %v1212 = vpop.permute.xlu0 %1211
        %vm1213 = vcmp.lt.s32.totalorder %v498, 96
        %v1214 = vsel %vm1213, %v1210, %v1212
        %v1215 = vsel %vm1213, %v1212, %v1210
        %s1216 = scalar_lea.vmem [#allocation3], 152
        %v1217 = vld [vmem:[%s1216] sm:$0xf]
        %1219 = vst [vmem:[#allocation1] ss:$4 sm:$0xff] %v1217
        %v1220 = vld.sshfl [vmem:[#allocation1] sm:$0xff pattern:$0x73625140]
        %v1221 = vld.sshfl [vmem:[#allocation1 + $0x8] sm:$0xff pattern:$0x73625140]
        %v1224 = vmul.f32 %v1214, %v1220
        %v1225 = vmul.f32 %v1215, %v1221
        %v1226 = vadd.f32 %v1207, %v1224
        %v1227 = vadd.f32 %v1208, %v1225
        %1228 = vrot.lane.b32.xlu0 %v491, 95
        %v1229 = vpop.permute.xlu0 %1228
        %1230 = vrot.lane.b32.xlu0 %v492, 95
        %v1231 = vpop.permute.xlu0 %1230
        %vm1232 = vcmp.lt.s32.totalorder %v498, 95
        %v1233 = vsel %vm1232, %v1229, %v1231
        %v1234 = vsel %vm1232, %v1231, %v1229
        %s1235 = scalar_lea.vmem [#allocation3], 156
        %v1236 = vld [vmem:[%s1235] sm:$0xf]
        %1238 = vst [vmem:[#allocation1] ss:$4 sm:$0xff] %v1236
        %v1239 = vld.sshfl [vmem:[#allocation1] sm:$0xff pattern:$0x73625140]
        %v1240 = vld.sshfl [vmem:[#allocation1 + $0x8] sm:$0xff pattern:$0x73625140]
        %v1243 = vmul.f32 %v1233, %v1239
        %v1244 = vmul.f32 %v1234, %v1240
        %v1245 = vadd.f32 %v1226, %v1243
        %v1246 = vadd.f32 %v1227, %v1244
        %1247 = vrot.lane.b32.xlu0 %v491, 94
        %v1248 = vpop.permute.xlu0 %1247
        %1249 = vrot.lane.b32.xlu0 %v492, 94
        %v1250 = vpop.permute.xlu0 %1249
        %vm1251 = vcmp.lt.s32.totalorder %v498, 94
        %v1252 = vsel %vm1251, %v1248, %v1250
        %v1253 = vsel %vm1251, %v1250, %v1248
        %s1254 = scalar_lea.vmem [#allocation3], 160
        %v1255 = vld [vmem:[%s1254] sm:$0xf]
        %1257 = vst [vmem:[#allocation1] ss:$4 sm:$0xff] %v1255
        %v1258 = vld.sshfl [vmem:[#allocation1] sm:$0xff pattern:$0x73625140]
        %v1259 = vld.sshfl [vmem:[#allocation1 + $0x8] sm:$0xff pattern:$0x73625140]
        %v1262 = vmul.f32 %v1252, %v1258
        %v1263 = vmul.f32 %v1253, %v1259
        %v1264 = vadd.f32 %v1245, %v1262
        %v1265 = vadd.f32 %v1246, %v1263
        %1266 = vrot.lane.b32.xlu0 %v491, 93
        %v1267 = vpop.permute.xlu0 %1266
        %1268 = vrot.lane.b32.xlu0 %v492, 93
        %v1269 = vpop.permute.xlu0 %1268
        %vm1270 = vcmp.lt.s32.totalorder %v498, 93
        %v1271 = vsel %vm1270, %v1267, %v1269
        %v1272 = vsel %vm1270, %v1269, %v1267
        %s1273 = scalar_lea.vmem [#allocation3], 164
        %v1274 = vld [vmem:[%s1273] sm:$0xf]
        %1276 = vst [vmem:[#allocation1] ss:$4 sm:$0xff] %v1274
        %v1277 = vld.sshfl [vmem:[#allocation1] sm:$0xff pattern:$0x73625140]
        %v1278 = vld.sshfl [vmem:[#allocation1 + $0x8] sm:$0xff pattern:$0x73625140]
        %v1281 = vmul.f32 %v1271, %v1277
        %v1282 = vmul.f32 %v1272, %v1278
        %v1283 = vadd.f32 %v1264, %v1281
        %v1284 = vadd.f32 %v1265, %v1282
        %1285 = vrot.lane.b32.xlu0 %v491, 83
        %v1286 = vpop.permute.xlu0 %1285
        %1287 = vrot.lane.b32.xlu0 %v492, 83
        %v1288 = vpop.permute.xlu0 %1287
        %vm1289 = vcmp.lt.s32.totalorder %v498, 83
        %v1290 = vsel %vm1289, %v1286, %v1288
        %v1291 = vsel %vm1289, %v1288, %v1286
        %s1292 = scalar_lea.vmem [#allocation3], 168
        %v1293 = vld [vmem:[%s1292] sm:$0xf]
        %1295 = vst [vmem:[#allocation1] ss:$4 sm:$0xff] %v1293
        %v1296 = vld.sshfl [vmem:[#allocation1] sm:$0xff pattern:$0x73625140]
        %v1297 = vld.sshfl [vmem:[#allocation1 + $0x8] sm:$0xff pattern:$0x73625140]
        %v1300 = vmul.f32 %v1290, %v1296
        %v1301 = vmul.f32 %v1291, %v1297
        %v1302 = vadd.f32 %v1283, %v1300
        %v1303 = vadd.f32 %v1284, %v1301
        %1304 = vrot.lane.b32.xlu0 %v491, 82
        %v1305 = vpop.permute.xlu0 %1304
        %1306 = vrot.lane.b32.xlu0 %v492, 82
        %v1307 = vpop.permute.xlu0 %1306
        %vm1308 = vcmp.lt.s32.totalorder %v498, 82
        %v1309 = vsel %vm1308, %v1305, %v1307
        %v1310 = vsel %vm1308, %v1307, %v1305
        %s1311 = scalar_lea.vmem [#allocation3], 172
        %v1312 = vld [vmem:[%s1311] sm:$0xf]
        %1314 = vst [vmem:[#allocation1] ss:$4 sm:$0xff] %v1312
        %v1315 = vld.sshfl [vmem:[#allocation1] sm:$0xff pattern:$0x73625140]
        %v1316 = vld.sshfl [vmem:[#allocation1 + $0x8] sm:$0xff pattern:$0x73625140]
        %v1319 = vmul.f32 %v1309, %v1315
        %v1320 = vmul.f32 %v1310, %v1316
        %v1321 = vadd.f32 %v1302, %v1319
        %v1322 = vadd.f32 %v1303, %v1320
        %1323 = vrot.lane.b32.xlu0 %v491, 81
        %v1324 = vpop.permute.xlu0 %1323
        %1325 = vrot.lane.b32.xlu0 %v492, 81
        %v1326 = vpop.permute.xlu0 %1325
        %vm1327 = vcmp.lt.s32.totalorder %v498, 81
        %v1328 = vsel %vm1327, %v1324, %v1326
        %v1329 = vsel %vm1327, %v1326, %v1324
        %s1330 = scalar_lea.vmem [#allocation3], 176
        %v1331 = vld [vmem:[%s1330] sm:$0xf]
        %1333 = vst [vmem:[#allocation1] ss:$4 sm:$0xff] %v1331
        %v1334 = vld.sshfl [vmem:[#allocation1] sm:$0xff pattern:$0x73625140]
        %v1335 = vld.sshfl [vmem:[#allocation1 + $0x8] sm:$0xff pattern:$0x73625140]
        %v1338 = vmul.f32 %v1328, %v1334
        %v1339 = vmul.f32 %v1329, %v1335
        %v1340 = vadd.f32 %v1321, %v1338
        %v1341 = vadd.f32 %v1322, %v1339
        %1342 = vrot.lane.b32.xlu0 %v491, 80
        %v1343 = vpop.permute.xlu0 %1342
        %1344 = vrot.lane.b32.xlu0 %v492, 80
        %v1345 = vpop.permute.xlu0 %1344
        %vm1346 = vcmp.lt.s32.totalorder %v498, 80
        %v1347 = vsel %vm1346, %v1343, %v1345
        %v1348 = vsel %vm1346, %v1345, %v1343
        %s1349 = scalar_lea.vmem [#allocation3], 180
        %v1350 = vld [vmem:[%s1349] sm:$0xf]
        %1352 = vst [vmem:[#allocation1] ss:$4 sm:$0xff] %v1350
        %v1353 = vld.sshfl [vmem:[#allocation1] sm:$0xff pattern:$0x73625140]
        %v1354 = vld.sshfl [vmem:[#allocation1 + $0x8] sm:$0xff pattern:$0x73625140]
        %v1357 = vmul.f32 %v1347, %v1353
        %v1358 = vmul.f32 %v1348, %v1354
        %v1359 = vadd.f32 %v1340, %v1357
        %v1360 = vadd.f32 %v1341, %v1358
        %1361 = vrot.lane.b32.xlu0 %v491, 79
        %v1362 = vpop.permute.xlu0 %1361
        %1363 = vrot.lane.b32.xlu0 %v492, 79
        %v1364 = vpop.permute.xlu0 %1363
        %vm1365 = vcmp.lt.s32.totalorder %v498, 79
        %v1366 = vsel %vm1365, %v1362, %v1364
        %v1367 = vsel %vm1365, %v1364, %v1362
        %s1368 = scalar_lea.vmem [#allocation3], 184
        %v1369 = vld [vmem:[%s1368] sm:$0xf]
        %1371 = vst [vmem:[#allocation1] ss:$4 sm:$0xff] %v1369
        %v1372 = vld.sshfl [vmem:[#allocation1] sm:$0xff pattern:$0x73625140]
        %v1373 = vld.sshfl [vmem:[#allocation1 + $0x8] sm:$0xff pattern:$0x73625140]
        %v1376 = vmul.f32 %v1366, %v1372
        %v1377 = vmul.f32 %v1367, %v1373
        %v1378 = vadd.f32 %v1359, %v1376
        %v1379 = vadd.f32 %v1360, %v1377
        %1380 = vrot.lane.b32.xlu0 %v491, 78
        %v1381 = vpop.permute.xlu0 %1380
        %1382 = vrot.lane.b32.xlu0 %v492, 78
        %v1383 = vpop.permute.xlu0 %1382
        %vm1384 = vcmp.lt.s32.totalorder %v498, 78
        %v1385 = vsel %vm1384, %v1381, %v1383
        %v1386 = vsel %vm1384, %v1383, %v1381
        %s1387 = scalar_lea.vmem [#allocation3], 188
        %v1388 = vld [vmem:[%s1387] sm:$0xf]
        %1390 = vst [vmem:[#allocation1] ss:$4 sm:$0xff] %v1388
        %v1391 = vld.sshfl [vmem:[#allocation1] sm:$0xff pattern:$0x73625140]
        %v1392 = vld.sshfl [vmem:[#allocation1 + $0x8] sm:$0xff pattern:$0x73625140]
        %v1395 = vmul.f32 %v1385, %v1391
        %v1396 = vmul.f32 %v1386, %v1392
        %v1397 = vadd.f32 %v1378, %v1395
        %v1398 = vadd.f32 %v1379, %v1396
        %1399 = vrot.lane.b32.xlu0 %v491, 77
        %v1400 = vpop.permute.xlu0 %1399
        %1401 = vrot.lane.b32.xlu0 %v492, 77
        %v1402 = vpop.permute.xlu0 %1401
        %vm1403 = vcmp.lt.s32.totalorder %v498, 77
        %v1404 = vsel %vm1403, %v1400, %v1402
        %v1405 = vsel %vm1403, %v1402, %v1400
        %s1406 = scalar_lea.vmem [#allocation3], 192
        %v1407 = vld [vmem:[%s1406] sm:$0xf]
        %1409 = vst [vmem:[#allocation1] ss:$4 sm:$0xff] %v1407
        %v1410 = vld.sshfl [vmem:[#allocation1] sm:$0xff pattern:$0x73625140]
        %v1411 = vld.sshfl [vmem:[#allocation1 + $0x8] sm:$0xff pattern:$0x73625140]
        %v1414 = vmul.f32 %v1404, %v1410
        %v1415 = vmul.f32 %v1405, %v1411
        %v1416 = vadd.f32 %v1397, %v1414
        %v1417 = vadd.f32 %v1398, %v1415
        %vm1418 = vcmask 1041408
        %v1419 = vsel %vm1418, %v1416, 0.0
        %v1420 = vrot.slane %v1419, 4
        %v1421 = vadd.f32 %v1419, %v1420
        %v1422 = vrot.slane %v1421, 2
        %v1423 = vadd.f32 %v1421, %v1422
        %v1424 = vrot.slane %v1423, 1
        %v1425 = vadd.f32 %v1423, %v1424
        %v1426 = vsel %vm1418, %v1417, 0.0
        %v1427 = vrot.slane %v1426, 4
        %v1428 = vadd.f32 %v1426, %v1427
        %v1429 = vrot.slane %v1428, 2
        %v1430 = vadd.f32 %v1428, %v1429
        %v1431 = vrot.slane %v1430, 1
        %v1432 = vadd.f32 %v1430, %v1431
        %v1433 = vxor.u32 %v1425, 2147483648
        %v1434 = vxor.u32 %v1432, 2147483648
        %v1435 = vmul.f32 %v1433, 1.442695
        %v1436 = vpow.pop %v1435
        %v1437 = vmul.f32 %v1434, 1.442695
        %v1438 = vpow.pop %v1437
        %v1439 = vadd.f32 %v1436, 1.0
        %v1440 = vadd.f32 %v1438, 1.0
        %v1441 = vrcp.pop %v1439
        %v1442 = vmul.f32 %v1439, %v1441
        %v1443 = vsub.f32 1.0, %v1442
        %v1444 = vmul.f32 %v1441, %v1443
        %v1445 = vadd.f32 %v1441, %v1444
        %vm1446 = vweird.f32 %v1439
        %vm1447 = vweird.f32 %v1441
        %vm1448 = vmor %vm1446, %vm1447
        %v1449 = vsel %vm1448, %v1441, %v1445
        %v1450 = vand.u32 2147483647, %v1439
        %vm1451 = vcmp.eq.f32.partialorder %v1450, 8.507059e+37
        %v1452 = vand.u32 %v1439, 2147483648
        %v1453 = vor.u32 1.1754944e-38, %v1452
        %v1454 = vsel %vm1451, %v1453, %v1449
        %v1455 = vmul.f32 1.0, %v1454
        %v1456 = vrcp.pop %v1440
        %v1457 = vmul.f32 %v1440, %v1456
        %v1458 = vsub.f32 1.0, %v1457
        %v1459 = vmul.f32 %v1456, %v1458
        %v1460 = vadd.f32 %v1456, %v1459
        %vm1461 = vweird.f32 %v1440
        %vm1462 = vweird.f32 %v1456
        %vm1463 = vmor %vm1461, %vm1462
        %v1464 = vsel %vm1463, %v1456, %v1460
        %v1465 = vand.u32 2147483647, %v1440
        %vm1466 = vcmp.eq.f32.partialorder %v1465, 8.507059e+37
        %v1467 = vand.u32 %v1440, 2147483648
        %v1468 = vor.u32 1.1754944e-38, %v1467
        %v1469 = vsel %vm1466, %v1468, %v1464
        %v1470 = vmul.f32 1.0, %v1469
        %v1471 = vmul.f32 %v1455, %v444
        %v1472 = vmul.f32 %v1470, %v445
        %v1473 = vmul.f32 %v1455, %v446
        %v1474 = vmul.f32 %v1470, %v447
        %v1475 = vmul.f32 %v1455, %v448
        %v1476 = vmul.f32 %v1470, %v449
        %v1477 = vmul.f32 %v1455, %v450
        %v1478 = vmul.f32 %v1470, %v451
        %1479 = vst [vmem:[%s234] sm:$0xff] %v1471
        %1480 = vst [vmem:[%s234 + $0x8] sm:$0xff] %v1472
        %1481 = vst [vmem:[%s234 + $0x10] sm:$0xff] %v1473
        %1482 = vst [vmem:[%s234 + $0x18] sm:$0xff] %v1474
        %1483 = vst [vmem:[%s234 + $0x20] sm:$0xff] %v1475
        %1484 = vst [vmem:[%s234 + $0x28] sm:$0xff] %v1476
        %1485 = vst [vmem:[%s234 + $0x30] sm:$0xff] %v1477
        %1486 = vst [vmem:[%s234 + $0x38] sm:$0xff] %v1478
        %s1487 = sand.u32 %s119, 1
        %s1488 = scalar_lea.sflag [#allocation5], %s1487
        %s1489 = sand.u32 %s119, 1
        %s1490 = smul.addr %s1489, 64
        %s1491 = scalar_lea.vmem [#allocation8], %s1490
        // Predicated region
        $region45: #{tpu_custom_call.1} parent=35 // pred_check
          %p1492 = pneg %p129
        $region46: #{tpu_custom_call.1} parent=35 // pred_check_branch
          %1494 = sbr.rel (%p1492) target = $region48
        $region47: #{tpu_custom_call.1} parent=35 // pred_region
          %1496 = vsyncadd %s1488, 0
          %s1497 = smul.addr %s22, 8
          %s1498 = smul.addr %s1497, 8
          %s1499 = scalar_lea.hbm %s4, %s1498
          %s1500 = sshll.u32 %s1491, 4
          %s1501 = int_to_ptr.vmem [resolvable:$true] %s1500
          %s1502 = sshll.u32 %s1499, 4
          %s1503 = int_to_ptr.hbm [resolvable:$true] %s1502
          %1508 = dma.vmem_to_hbm [thread:$0]  %s1501, 1024, %s1503, %s1488, 256, 256, 16
        $region48: #{tpu_custom_call.1} parent=35 // pred_fallthru
          _
      $region36: #{tpu_custom_call.1} parent=5 // pred_fallthru
        _
      %p1509 = scmp.le.s32.totalorder 2, %s17
      // Predicated region
      $region49: #{tpu_custom_call.1} parent=5 // pred_check
        %p1510 = pneg %p1509
      $region50: #{tpu_custom_call.1} parent=5 // pred_check_branch
        %1512 = sbr.rel (%p1510) target = $region52
      $region51: #{tpu_custom_call.1} parent=5 // pred_region
        %s1513 = ssub.s32 %s17, 2
        // Predicated region
        $region53: #{tpu_custom_call.1} parent=51 // pred_check
          %p1514 = pneg %p135
        $region54: #{tpu_custom_call.1} parent=51 // pred_check_branch
          %1516 = sbr.rel (%p1514) target = $region56
        $region55: #{tpu_custom_call.1} parent=51 // pred_region
          %s1517 = sand.u32 %s120, 1
          %s1518 = scalar_lea.sflag [#allocation5], %s1517
          %s1519 = sand.u32 %s120, 1
          %s1520 = smul.addr %s1519, 64
          %s1521 = scalar_lea.vmem [#allocation8], %s1520
          %1523 = dma.done %s1518, 1024
        $region56: #{tpu_custom_call.1} parent=51 // pred_fallthru
          _
      $region52: #{tpu_custom_call.1} parent=5 // pred_fallthru
        _
    $region6: #{tpu_custom_call.1} parent=1 // loop_footer
      %s21 = sadd.s32 1, %s17
    $region7: #{tpu_custom_call.1} parent=1 // loop_footer_branch
      %16 = sbr.rel target = $region3
    $region8: #{tpu_custom_call.1} parent=1 // loop_exit
      _
    %1524 = vsyncpa [#allocation4], 1
    %s1525 = scalar_lea.sflag [#allocation4], 1
    %1526 = vsyncpa %s1525, 1
    %1527 = vsyncpa [#allocation7], 1
    %s1528 = scalar_lea.sflag [#allocation7], 1
    %1529 = vsyncpa %s1528, 1
    %1530 = vsyncpa [#allocation5], 1
    %s1531 = scalar_lea.sflag [#allocation5], 1
    %1532 = vsyncpa %s1531, 1

</llo_original>
